<compile_context>
chip_gen: v7x
topology: tpu7x:2x2x1
jax: 0.10.0
libtpu: 0.0.40
codegen_flags: <defaults>
</compile_context>

<pallas_src>
import functools

import jax
import jax.numpy as jnp
from jax import lax
from jax.experimental import pallas as pl
from jax.experimental.pallas import tpu as pltpu

EPS = 1e-6


def _round_up(x, m):
  return (x + m - 1) // m * m


def _rgbuv_hist_kernel(bins_ref, x_ref, o_ref, acc_ref, lhs_ref, rhs_ref, *,
                       h, sigma, n_valid, tn, intensity_scale, mask_tail):
  # bins_ref: (h, 1) f32 histogram bin centers pre-divided by sigma
  # x_ref:    (1, 3, TN) f32 pixel tile (channel-major, pixels lane-dense)
  # o_ref:    (1, 3, h, h) f32 output block (written at the last pixel tile)
  # acc_ref:  (2h, 2h) f32 accumulator scratch
  # lhs_ref:  (2h, TN) f32 scratch  [iy*K(lr-lg) ; iy*K(lr-lb)]
  # rhs_ref:  (2h, TN) f32 scratch  [   K(lr-lb) ;    K(lg-lb)]
  k = pl.program_id(1)
  last = pl.num_programs(1) - 1

  @pl.when(k == 0)
  def _init():
    acc_ref[...] = jnp.zeros_like(acc_ref)

  x = jnp.clip(x_ref[0], 0.0, 1.0)                     # (3, TN)
  logx = jnp.log(x + EPS)                              # (3, TN) single log call
  lr = logx[0:1, :]                                    # (1, TN)
  lg = logx[1:2, :]
  lb = logx[2:3, :]

  if intensity_scale:
    iy = jnp.sqrt(jnp.sum(x * x, axis=0, keepdims=True) + EPS)   # (1, TN)
  else:
    iy = jnp.ones((1, tn), jnp.float32)

  inv_sigma = 1.0 / sigma
  bins_s = bins_ref[...]                               # (h, 1), already /sigma

  def kern(u_scaled):                                  # (1, TN) -> (h, TN)
    d = u_scaled - bins_s                              # no abs: squared anyway
    return 1.0 / (1.0 + d * d)

  a_half = kern((lr - lg) * inv_sigma)                 # A = K(log r - log g)
  b_half = kern((lr - lb) * inv_sigma)                 # B = K(log r - log b)
  c_half = kern((lg - lb) * inv_sigma)                 # C = K(log g - log b)

  # Write responses directly into their final scratch locations (no concat).
  rhs_ref[0:h, :] = b_half
  rhs_ref[h:2 * h, :] = c_half
  lhs_ref[0:h, :] = iy * a_half
  lhs_ref[h:2 * h, :] = iy * b_half

  if mask_tail:
    # Zero out padded pixels; only the final tile contains any, so gate it.
    @pl.when(k == last)
    def _mask():
      lane = lax.broadcasted_iota(jnp.int32, (1, tn), 1)
      valid = (k * tn + lane) < n_valid                # (1, TN) bool
      lhs_ref[...] = jnp.where(valid, lhs_ref[...], 0.0)

  # M += lhs @ rhs^T, contracting the lane (pixel) axis of both operands.
  acc_ref[...] += lax.dot_general(lhs_ref[...], rhs_ref[...],
                                  (((1,), (1,)), ((), ())),
                                  preferred_element_type=jnp.float32)

  @pl.when(k == last)
  def _finalize():
    m = acc_ref[...]                                   # (2h, 2h)
    h0 = m[0:h, 0:h]                                   # (iy*A)^T B
    h1p = m[0:h, h:2 * h]                              # (iy*A)^T C  (row flip)
    h2p = m[h:2 * h, h:2 * h]                          # (iy*B)^T C  (row+col flip)

    # Exchange (reversal) permutation matrix; matmul with it is an exact flip.
    row = lax.broadcasted_iota(jnp.int32, (h, h), 0)
    col = lax.broadcasted_iota(jnp.int32, (h, h), 1)
    rev = (row + col == h - 1).astype(jnp.float32)
    h1 = jnp.dot(rev, h1p, preferred_element_type=jnp.float32)
    h2 = jnp.dot(jnp.dot(rev, h2p, preferred_element_type=jnp.float32), rev,
                 preferred_element_type=jnp.float32)

    # Flips preserve sums, so normalize with the unflipped blocks.
    total = jnp.sum(h0) + jnp.sum(h1p) + jnp.sum(h2p)
    inv = 1.0 / (total + EPS)
    o_ref[0, 0, :, :] = h0 * inv
    o_ref[0, 1, :, :] = h1 * inv
    o_ref[0, 2, :, :] = h2 * inv


def rgbuv_hist_block(x, *, h=64, insz=150, sigma=0.02, intensity_scale=True,
                     hist_boundary=(-3.0, 3.0), pixels_per_tile=8192):
  """Pallas implementation of RGBuvHistBlock.forward (inverse-quadratic,
  green_only=False). x: (B, C, H, W) float32, NCHW."""
  B, C, H, W = x.shape
  assert H <= insz and W <= insz, "resize branch not implemented"
  lo, hi = float(min(hist_boundary)), float(max(hist_boundary))
  # The 3-matrix bin-flip dedup requires bins symmetric about 0.
  assert abs(lo + hi) < 1e-9, "hist_boundary must be symmetric about 0"
  if C > 3:
    x = x[:, :3, :, :]
  N = H * W
  # Channel-major (B, 3, N): matches torch.reshape(X[l], (3, -1)); no transpose.
  x_flat = jnp.reshape(x.astype(jnp.float32), (B, 3, N))

  tn = _round_up(min(int(pixels_per_tile), _round_up(N, 128)), 128)
  n_pad = _round_up(N, tn)
  if n_pad != N:
    x_flat = jnp.pad(x_flat, ((0, 0), (0, 0), (0, n_pad - N)))
  num_k = n_pad // tn

  # Fold sigma into the bins (review item #2).
  bins_scaled = (jnp.linspace(lo, hi, h, dtype=jnp.float32)
                 / jnp.float32(sigma)).reshape(h, 1)

  kernel = functools.partial(
      _rgbuv_hist_kernel, h=h, sigma=float(sigma), n_valid=N, tn=tn,
      intensity_scale=intensity_scale, mask_tail=(n_pad != N))

  return pl.pallas_call(
      kernel,
      out_shape=jax.ShapeDtypeStruct((B, 3, h, h), jnp.float32),
      grid=(B, num_k),
      in_specs=[
          pl.BlockSpec((h, 1), lambda b, k: (0, 0)),
          pl.BlockSpec((1, 3, tn), lambda b, k: (b, 0, k)),
      ],
      out_specs=pl.BlockSpec((1, 3, h, h), lambda b, k: (b, 0, 0, 0)),
      scratch_shapes=[
          pltpu.VMEM((2 * h, 2 * h), jnp.float32),   # accumulator
          pltpu.VMEM((2 * h, tn), jnp.float32),      # lhs
          pltpu.VMEM((2 * h, tn), jnp.float32),      # rhs
      ],
      compiler_params=pltpu.CompilerParams(
          dimension_semantics=("parallel", "arbitrary")),
  )(bins_scaled, x_flat)


def _reference(x, *, h=64, sigma=0.02, lo=-3.0, hi=3.0):
  """Pure-JAX reference mirroring the PyTorch forward."""
  x = jnp.clip(x, 0.0, 1.0)
  if x.shape[1] > 3:
    x = x[:, :3, :, :]
  bins = jnp.linspace(lo, hi, h, dtype=jnp.float32)

  def one(img):
    I = jnp.reshape(img, (3, -1)).T                    # (N, 3)
    II = I ** 2
    Iy = jnp.sqrt(II[:, 0] + II[:, 1] + II[:, 2] + EPS)[:, None]
    logI = jnp.log(I + EPS)

    def k(u):
      d = jnp.abs(u[:, None] - bins[None, :])
      return 1.0 / (1.0 + d * d / sigma ** 2)

    def hist(ci, cu, cv):
      ku = k(logI[:, ci] - logI[:, cu])
      kv = k(logI[:, ci] - logI[:, cv])
      return (Iy * ku).T @ kv

    h0 = hist(0, 1, 2)
    h1 = hist(1, 0, 2)
    h2 = hist(2, 0, 1)
    return jnp.stack([h0, h1, h2], axis=0)

  hists = jax.vmap(one)(x)
  denom = hists.sum(axis=(1, 2, 3)).reshape(-1, 1, 1, 1) + EPS
  return hists / denom


if __name__ == "__main__":
  key = jax.random.PRNGKey(0)
  B, C, H, W = 2, 4, 16, 16
  x = jax.random.uniform(key, (B, C, H, W), dtype=jnp.float32, minval=0.0,
                         maxval=1.2)  # some values > 1 to exercise the clamp

  out = jax.block_until_ready(rgbuv_hist_block(x))
  ref = jax.block_until_ready(_reference(x))
  assert out.shape == (B, 3, 64, 64), out.shape
  assert jnp.allclose(out, ref, atol=1e-5, rtol=1e-5), float(
      jnp.max(jnp.abs(out - ref)))

  # Second case with N not a multiple of 128 to exercise the padded-tail mask.
  x2 = jax.random.uniform(jax.random.PRNGKey(1), (1, 3, 15, 17),
                          dtype=jnp.float32, minval=0.0, maxval=1.2)
  out2 = jax.block_until_ready(rgbuv_hist_block(x2))
  ref2 = jax.block_until_ready(_reference(x2))
  assert jnp.allclose(out2, ref2, atol=1e-5, rtol=1e-5), float(
      jnp.max(jnp.abs(out2 - ref2)))

  print("KERNEL_OK")
</pallas_src>

<mosaic_0001>
module attributes {stable_mosaic.version = 11 : i64} {
  func.func @_rgbuv_hist_kernel(%arg0: i32, %arg1: i32, %arg2: memref<64x1xf32, #tpu.memory_space<vmem>>, %arg3: memref<1x3x256xf32, #tpu.memory_space<vmem>>, %arg4: memref<1x3x64x64xf32, #tpu.memory_space<vmem>>, %arg5: memref<128x128xf32, #tpu.memory_space<vmem>>, %arg6: memref<128x256xf32, #tpu.memory_space<vmem>>, %arg7: memref<128x256xf32, #tpu.memory_space<vmem>>) attributes {dimension_semantics = [#tpu.dimension_semantics<parallel>, #tpu.dimension_semantics<arbitrary>], iteration_bounds = array<i64: 2, 1>, scalar_prefetch = 0 : i64, scratch_operands = 3 : i64, tpu.core_type = #tpu.core_type<tc>, window_params = [{pipeline_mode = #tpu.pipeline_mode<synchronous>, transform_indices = @transform_0, window_bounds = array<i64: 64, 1>}, {transform_indices = @transform_1, window_bounds = array<i64: 1, 3, 256>}, {transform_indices = @transform_2, window_bounds = array<i64: 1, 3, 64, 64>}]} {
    %c0_i32 = arith.constant 0 : i32
    %0 = arith.cmpi eq, %arg1, %c0_i32 : i32
    %1 = arith.extui %0 : i1 to i32
    %c0_i32_0 = arith.constant 0 : i32
    %2 = arith.cmpi ne, %1, %c0_i32_0 : i32
    scf.if %2 {
      %cst_36 = arith.constant 0.000000e+00 : f32
      %72 = vector.broadcast %cst_36 : f32 to vector<128x128xf32>
      %c0_37 = arith.constant 0 : index
      %c0_38 = arith.constant 0 : index
      %73 = vector.load %arg5[%c0_37, %c0_38] : memref<128x128xf32, #tpu.memory_space<vmem>>, vector<128x128xf32>
      tpu.vector_store %arg5[%c0_37, %c0_38], %72 {strides = array<i32>} : memref<128x128xf32, #tpu.memory_space<vmem>>, vector<128x128xf32>,
    } else {
    }
    %c0 = arith.constant 0 : index
    %c0_1 = arith.constant 0 : index
    %c0_2 = arith.constant 0 : index
    %3 = vector.load %arg3[%c0, %c0_1, %c0_2] : memref<1x3x256xf32, #tpu.memory_space<vmem>>, vector<1x3x256xf32>
    %4 = vector.shape_cast %3 : vector<1x3x256xf32> to vector<3x256xf32>
    %cst = arith.constant 0.000000e+00 : f32
    %cst_3 = arith.constant 1.000000e+00 : f32
    %5 = vector.broadcast %cst : f32 to vector<3x256xf32>
    %6 = arith.maximumf %5, %4 : vector<3x256xf32>
    %7 = vector.broadcast %cst_3 : f32 to vector<3x256xf32>
    %8 = arith.minimumf %7, %6 : vector<3x256xf32>
    %cst_4 = arith.constant 9.99999997E-7 : f32
    %9 = vector.broadcast %cst_4 : f32 to vector<3x256xf32>
    %10 = arith.addf %8, %9 : vector<3x256xf32>
    %11 = math.log %10 : vector<3x256xf32>
    %12 = vector.extract_strided_slice %11 {offsets = [0, 0], sizes = [1, 256], strides = [1, 1]} : vector<3x256xf32> to vector<1x256xf32>
    %13 = vector.extract_strided_slice %11 {offsets = [1, 0], sizes = [1, 256], strides = [1, 1]} : vector<3x256xf32> to vector<1x256xf32>
    %14 = vector.extract_strided_slice %11 {offsets = [2, 0], sizes = [1, 256], strides = [1, 1]} : vector<3x256xf32> to vector<1x256xf32>
    %15 = arith.mulf %8, %8 : vector<3x256xf32>
    %cst_5 = arith.constant dense<0.000000e+00> : vector<256xf32>
    %16 = vector.multi_reduction <add>, %15, %cst_5 [0] : vector<3x256xf32> to vector<256xf32>
    %17 = vector.shape_cast %16 : vector<256xf32> to vector<1x256xf32>
    %cst_6 = arith.constant 9.99999997E-7 : f32
    %18 = vector.broadcast %cst_6 : f32 to vector<1x256xf32>
    %19 = arith.addf %17, %18 : vector<1x256xf32>
    %20 = math.sqrt %19 : vector<1x256xf32>
    %c0_7 = arith.constant 0 : index
    %c0_8 = arith.constant 0 : index
    %21 = vector.load %arg2[%c0_7, %c0_8] : memref<64x1xf32, #tpu.memory_space<vmem>>, vector<64x1xf32>
    %22 = arith.subf %12, %13 : vector<1x256xf32>
    %cst_9 = arith.constant 5.000000e+01 : f32
    %23 = vector.broadcast %cst_9 : f32 to vector<1x256xf32>
    %24 = arith.mulf %22, %23 : vector<1x256xf32>
    %25 = vector.broadcast %24 : vector<1x256xf32> to vector<64x256xf32>
    %26 = vector.broadcast %21 : vector<64x1xf32> to vector<64x256xf32>
    %27 = arith.subf %25, %26 : vector<64x256xf32>
    %28 = arith.mulf %27, %27 : vector<64x256xf32>
    %cst_10 = arith.constant 1.000000e+00 : f32
    %29 = vector.broadcast %cst_10 : f32 to vector<64x256xf32>
    %30 = arith.addf %29, %28 : vector<64x256xf32>
    %cst_11 = arith.constant 1.000000e+00 : f32
    %31 = vector.broadcast %cst_11 : f32 to vector<64x256xf32>
    %32 = arith.divf %31, %30 : vector<64x256xf32>
    %33 = arith.subf %12, %14 : vector<1x256xf32>
    %cst_12 = arith.constant 5.000000e+01 : f32
    %34 = vector.broadcast %cst_12 : f32 to vector<1x256xf32>
    %35 = arith.mulf %33, %34 : vector<1x256xf32>
    %36 = vector.broadcast %35 : vector<1x256xf32> to vector<64x256xf32>
    %37 = vector.broadcast %21 : vector<64x1xf32> to vector<64x256xf32>
    %38 = arith.subf %36, %37 : vector<64x256xf32>
    %39 = arith.mulf %38, %38 : vector<64x256xf32>
    %cst_13 = arith.constant 1.000000e+00 : f32
    %40 = vector.broadcast %cst_13 : f32 to vector<64x256xf32>
    %41 = arith.addf %40, %39 : vector<64x256xf32>
    %cst_14 = arith.constant 1.000000e+00 : f32
    %42 = vector.broadcast %cst_14 : f32 to vector<64x256xf32>
    %43 = arith.divf %42, %41 : vector<64x256xf32>
    %44 = arith.subf %13, %14 : vector<1x256xf32>
    %cst_15 = arith.constant 5.000000e+01 : f32
    %45 = vector.broadcast %cst_15 : f32 to vector<1x256xf32>
    %46 = arith.mulf %44, %45 : vector<1x256xf32>
    %47 = vector.broadcast %46 : vector<1x256xf32> to vector<64x256xf32>
    %48 = vector.broadcast %21 : vector<64x1xf32> to vector<64x256xf32>
    %49 = arith.subf %47, %48 : vector<64x256xf32>
    %50 = arith.mulf %49, %49 : vector<64x256xf32>
    %cst_16 = arith.constant 1.000000e+00 : f32
    %51 = vector.broadcast %cst_16 : f32 to vector<64x256xf32>
    %52 = arith.addf %51, %50 : vector<64x256xf32>
    %cst_17 = arith.constant 1.000000e+00 : f32
    %53 = vector.broadcast %cst_17 : f32 to vector<64x256xf32>
    %54 = arith.divf %53, %52 : vector<64x256xf32>
    %c0_18 = arith.constant 0 : index
    %c0_19 = arith.constant 0 : index
    %55 = vector.load %arg7[%c0_18, %c0_19] : memref<128x256xf32, #tpu.memory_space<vmem>>, vector<64x256xf32>
    tpu.vector_store %arg7[%c0_18, %c0_19], %43 {strides = array<i32>} : memref<128x256xf32, #tpu.memory_space<vmem>>, vector<64x256xf32>,
    %c64 = arith.constant 64 : index
    %c0_20 = arith.constant 0 : index
    %56 = vector.load %arg7[%c64, %c0_20] : memref<128x256xf32, #tpu.memory_space<vmem>>, vector<64x256xf32>
    tpu.vector_store %arg7[%c64, %c0_20], %54 {strides = array<i32>} : memref<128x256xf32, #tpu.memory_space<vmem>>, vector<64x256xf32>,
    %57 = vector.broadcast %20 : vector<1x256xf32> to vector<64x256xf32>
    %58 = arith.mulf %57, %32 : vector<64x256xf32>
    %c0_21 = arith.constant 0 : index
    %c0_22 = arith.constant 0 : index
    %59 = vector.load %arg6[%c0_21, %c0_22] : memref<128x256xf32, #tpu.memory_space<vmem>>, vector<64x256xf32>
    tpu.vector_store %arg6[%c0_21, %c0_22], %58 {strides = array<i32>} : memref<128x256xf32, #tpu.memory_space<vmem>>, vector<64x256xf32>,
    %60 = vector.broadcast %20 : vector<1x256xf32> to vector<64x256xf32>
    %61 = arith.mulf %60, %43 : vector<64x256xf32>
    %c64_23 = arith.constant 64 : index
    %c0_24 = arith.constant 0 : index
    %62 = vector.load %arg6[%c64_23, %c0_24] : memref<128x256xf32, #tpu.memory_space<vmem>>, vector<64x256xf32>
    tpu.vector_store %arg6[%c64_23, %c0_24], %61 {strides = array<i32>} : memref<128x256xf32, #tpu.memory_space<vmem>>, vector<64x256xf32>,
    %c0_25 = arith.constant 0 : index
    %c0_26 = arith.constant 0 : index
    %63 = vector.load %arg5[%c0_25, %c0_26] : memref<128x128xf32, #tpu.memory_space<vmem>>, vector<128x128xf32>
    %c0_27 = arith.constant 0 : index
    %c0_28 = arith.constant 0 : index
    %64 = vector.load %arg6[%c0_27, %c0_28] : memref<128x256xf32, #tpu.memory_space<vmem>>, vector<128x256xf32>
    %c0_29 = arith.constant 0 : index
    %c0_30 = arith.constant 0 : index
    %65 = vector.load %arg7[%c0_29, %c0_30] : memref<128x256xf32, #tpu.memory_space<vmem>>, vector<128x256xf32>
    %cst_31 = arith.constant dense<0.000000e+00> : vector<128x128xf32>
    %66 = tpu.matmul %64, %65, %cst_31 {dimension_numbers = #tpu.dot_dimension_numbers<[1], [1], [0], [0], [0, 0, 1, 0], [], []>} : vector<128x256xf32>, vector<128x256xf32>, vector<128x128xf32> -> vector<128x128xf32>
    %67 = arith.addf %63, %66 : vector<128x128xf32>
    %c0_32 = arith.constant 0 : index
    %c0_33 = arith.constant 0 : index
    %68 = vector.load %arg5[%c0_32, %c0_33] : memref<128x128xf32, #tpu.memory_space<vmem>>, vector<128x128xf32>
    tpu.vector_store %arg5[%c0_32, %c0_33], %67 {strides = array<i32>} : memref<128x128xf32, #tpu.memory_space<vmem>>, vector<128x128xf32>,
    %c0_i32_34 = arith.constant 0 : i32
    %69 = arith.cmpi eq, %arg1, %c0_i32_34 : i32
    %70 = arith.extui %69 : i1 to i32
    %c0_i32_35 = arith.constant 0 : i32
    %71 = arith.cmpi ne, %70, %c0_i32_35 : i32
    scf.if %71 {
      %c0_36 = arith.constant 0 : index
      %c0_37 = arith.constant 0 : index
      %72 = vector.load %arg5[%c0_36, %c0_37] : memref<128x128xf32, #tpu.memory_space<vmem>>, vector<128x128xf32>
      %73 = vector.extract_strided_slice %72 {offsets = [0, 0], sizes = [64, 64], strides = [1, 1]} : vector<128x128xf32> to vector<64x64xf32>
      %74 = vector.extract_strided_slice %72 {offsets = [0, 64], sizes = [64, 64], strides = [1, 1]} : vector<128x128xf32> to vector<64x64xf32>
      %75 = vector.extract_strided_slice %72 {offsets = [64, 64], sizes = [64, 64], strides = [1, 1]} : vector<128x128xf32> to vector<64x64xf32>
      %76 = tpu.iota {dimensions = array<i32: 0>} : vector<64x64xi32>
      %77 = tpu.iota {dimensions = array<i32: 1>} : vector<64x64xi32>
      %78 = arith.addi %76, %77 : vector<64x64xi32>
      %c63_i32 = arith.constant 63 : i32
      %79 = vector.broadcast %c63_i32 : i32 to vector<64x64xi32>
      %80 = arith.cmpi eq, %78, %79 : vector<64x64xi32>
      %81 = arith.extui %80 : vector<64x64xi1> to vector<64x64xi32>
      %82 = arith.sitofp %81 : vector<64x64xi32> to vector<64x64xf32>
      %cst_38 = arith.constant dense<0.000000e+00> : vector<64x64xf32>
      %83 = tpu.matmul %82, %74, %cst_38 {dimension_numbers = #tpu.dot_dimension_numbers<[1], [0], [0], [1], [0, 0, 1, 1], [], []>} : vector<64x64xf32>, vector<64x64xf32>, vector<64x64xf32> -> vector<64x64xf32>
      %cst_39 = arith.constant dense<0.000000e+00> : vector<64x64xf32>
      %84 = tpu.matmul %82, %75, %cst_39 {dimension_numbers = #tpu.dot_dimension_numbers<[1], [0], [0], [1], [0, 0, 1, 1], [], []>} : vector<64x64xf32>, vector<64x64xf32>, vector<64x64xf32> -> vector<64x64xf32>
      %cst_40 = arith.constant dense<0.000000e+00> : vector<64x64xf32>
      %85 = tpu.matmul %84, %82, %cst_40 {dimension_numbers = #tpu.dot_dimension_numbers<[1], [0], [0], [1], [0, 0, 1, 1], [], []>} : vector<64x64xf32>, vector<64x64xf32>, vector<64x64xf32> -> vector<64x64xf32>
      %86 = vector.shape_cast %73 : vector<64x64xf32> to vector<1x64x64xf32>
      %cst_41 = arith.constant dense<0.000000e+00> : vector<1xf32>
      %87 = vector.multi_reduction <add>, %86, %cst_41 [1, 2] : vector<1x64x64xf32> to vector<1xf32>
      %88 = vector.shape_cast %87 : vector<1xf32> to vector<1x1x1xf32>
      %89 = vector.extract %88[0, 0, 0] : f32 from vector<1x1x1xf32>
      %90 = vector.shape_cast %74 : vector<64x64xf32> to vector<1x64x64xf32>
      %cst_42 = arith.constant dense<0.000000e+00> : vector<1xf32>
      %91 = vector.multi_reduction <add>, %90, %cst_42 [1, 2] : vector<1x64x64xf32> to vector<1xf32>
      %92 = vector.shape_cast %91 : vector<1xf32> to vector<1x1x1xf32>
      %93 = vector.extract %92[0, 0, 0] : f32 from vector<1x1x1xf32>
      %94 = arith.addf %89, %93 : f32
      %95 = vector.shape_cast %75 : vector<64x64xf32> to vector<1x64x64xf32>
      %cst_43 = arith.constant dense<0.000000e+00> : vector<1xf32>
      %96 = vector.multi_reduction <add>, %95, %cst_43 [1, 2] : vector<1x64x64xf32> to vector<1xf32>
      %97 = vector.shape_cast %96 : vector<1xf32> to vector<1x1x1xf32>
      %98 = vector.extract %97[0, 0, 0] : f32 from vector<1x1x1xf32>
      %99 = arith.addf %94, %98 : f32
      %cst_44 = arith.constant 9.99999997E-7 : f32
      %100 = arith.addf %99, %cst_44 : f32
      %cst_45 = arith.constant 1.000000e+00 : f32
      %101 = arith.divf %cst_45, %100 : f32
      %102 = vector.broadcast %101 : f32 to vector<64x64xf32>
      %103 = arith.mulf %73, %102 : vector<64x64xf32>
      %c0_46 = arith.constant 0 : index
      %c0_47 = arith.constant 0 : index
      %c0_48 = arith.constant 0 : index
      %c0_49 = arith.constant 0 : index
      %104 = vector.load %arg4[%c0_46, %c0_47, %c0_48, %c0_49] : memref<1x3x64x64xf32, #tpu.memory_space<vmem>>, vector<1x1x64x64xf32>
      %105 = vector.shape_cast %104 : vector<1x1x64x64xf32> to vector<64x64xf32>
      %106 = vector.shape_cast %103 : vector<64x64xf32> to vector<1x1x64x64xf32>
      tpu.vector_store %arg4[%c0_46, %c0_47, %c0_48, %c0_49], %106 {strides = array<i32>} : memref<1x3x64x64xf32, #tpu.memory_space<vmem>>, vector<1x1x64x64xf32>,
      %107 = vector.broadcast %101 : f32 to vector<64x64xf32>
      %108 = arith.mulf %83, %107 : vector<64x64xf32>
      %c0_50 = arith.constant 0 : index
      %c1 = arith.constant 1 : index
      %c0_51 = arith.constant 0 : index
      %c0_52 = arith.constant 0 : index
      %109 = vector.load %arg4[%c0_50, %c1, %c0_51, %c0_52] : memref<1x3x64x64xf32, #tpu.memory_space<vmem>>, vector<1x1x64x64xf32>
      %110 = vector.shape_cast %109 : vector<1x1x64x64xf32> to vector<64x64xf32>
      %111 = vector.shape_cast %108 : vector<64x64xf32> to vector<1x1x64x64xf32>
      tpu.vector_store %arg4[%c0_50, %c1, %c0_51, %c0_52], %111 {strides = array<i32>} : memref<1x3x64x64xf32, #tpu.memory_space<vmem>>, vector<1x1x64x64xf32>,
      %112 = vector.broadcast %101 : f32 to vector<64x64xf32>
      %113 = arith.mulf %85, %112 : vector<64x64xf32>
      %c0_53 = arith.constant 0 : index
      %c2 = arith.constant 2 : index
      %c0_54 = arith.constant 0 : index
      %c0_55 = arith.constant 0 : index
      %114 = vector.load %arg4[%c0_53, %c2, %c0_54, %c0_55] : memref<1x3x64x64xf32, #tpu.memory_space<vmem>>, vector<1x1x64x64xf32>
      %115 = vector.shape_cast %114 : vector<1x1x64x64xf32> to vector<64x64xf32>
      %116 = vector.shape_cast %113 : vector<64x64xf32> to vector<1x1x64x64xf32>
      tpu.vector_store %arg4[%c0_53, %c2, %c0_54, %c0_55], %116 {strides = array<i32>} : memref<1x3x64x64xf32, #tpu.memory_space<vmem>>, vector<1x1x64x64xf32>,
    } else {
    }
    return
  }
  func.func @transform_0(%arg0: i32, %arg1: i32) -> (i32, i32) {
    %c0_i32 = arith.constant 0 : i32
    %c0_i32_0 = arith.constant 0 : i32
    %c0_i32_1 = arith.constant 0 : i32
    return %c0_i32, %c0_i32_0 : i32, i32
  }
  func.func @transform_1(%arg0: i32, %arg1: i32) -> (i32, i32, i32) {
    %c0_i32 = arith.constant 0 : i32
    %c0_i32_0 = arith.constant 0 : i32
    return %arg0, %c0_i32, %arg1 : i32, i32, i32
  }
  func.func @transform_2(%arg0: i32, %arg1: i32) -> (i32, i32, i32, i32) {
    %c0_i32 = arith.constant 0 : i32
    %c0_i32_0 = arith.constant 0 : i32
    %c0_i32_1 = arith.constant 0 : i32
    %c0_i32_2 = arith.constant 0 : i32
    return %arg0, %c0_i32, %c0_i32_0, %c0_i32_1 : i32, i32, i32, i32
  }
}

</mosaic_0001>

<llo_original>
// kernel: tpu_custom_call.1
$region0: #{tpu_custom_call.1}
  #allocation0 [shape = 'u32[]', space=smem, size = 0x4, offset = 0x4, fixed_abs, tag = 'smem constant byte address 0x4 - core index']
  #allocation1 [shape = 'u32[144,128]{1,0:T(1,128)}', space=vmem, size = 0x12000, scoped, tag = 'internal scratch']
  #allocation2 [shape = 'f32[128,128]{1,0:T(8,128)}', space=vmem, size = 0x10000, scoped, tag = 'scratch operand']
  #allocation3 [shape = 'f32[128,256]{1,0:T(8,128)}', space=vmem, size = 0x20000, scoped, tag = 'scratch operand']
  #allocation4 [shape = 'f32[128,256]{1,0:T(8,128)}', space=vmem, size = 0x20000, scoped, tag = 'scratch operand']
  %s0 = inlined_call_operand.vmem [shape: f32[64,1], index: 0, kind: input, shape index: {}]
  %s1 = inlined_call_operand.vmem [shape: f32[2,3,256], index: 1, kind: input, shape index: {}]
  %s2 = inlined_call_operand.hbm [shape: f32[2,3,64,64], index: 2, kind: output, shape index: {}]
  %s3 = sld [smem:[#allocation0]]
  $region49: #{tpu_custom_call.1} parent=0
    _
  %s5 = ssub.s32 1, %s3
  %s6 = scalar_select 0, %s5, %s3
  $region1: #{tpu_custom_call.1} parent=0
    #allocation5 [shape = 'u8[196608]{0}', space=vmem, size = 0x30000, scoped, tag = 'output window, operand 0']
    #allocation6 [shape = 's32[2]{0}', space=sflag, size = 0x8, scoped, tag = 'scoped memory for tpu_custom_call.1']
    %7 = vsyncpa [#allocation6], 0
    %s8 = scalar_lea.sflag [#allocation6], 1
    %9 = vsyncpa %s8, 0
    loop: start=0, step=1, limit=4
    $region2: #{tpu_custom_call.1} parent=1 // loop_pre_header
      _
    $region3: #{tpu_custom_call.1} parent=1 // loop_header
      %s11 = sphi 0, %s15
      %p12 = scmp.ge.s32.totalorder %s11, 4
      %s18 = sphi 0, %s30
      %s19 = sphi 0, %s26
      %s20 = sphi 0, %s18
      %s21 = sphi 0, %s19
      %s22 = sphi 0, %s20
      %s23 = sphi 0, %s21
      %s31 = sphi 0, %s31
      %s33 = sphi 0, %s31
      %s34 = sphi 0, %s33
      %s48 = sphi 0, %s34
      %s56 = sphi 0, %s58
      %s59 = sphi 0, %s56
      %s60 = sphi 0, %s59
      %s76 = sphi 0, %s60
      %s82 = sphi 0, %s84
      %s85 = sphi 0, %s82
      %s86 = sphi 0, %s85
      %s102 = sphi 0, %s86
    $region4: #{tpu_custom_call.1} parent=1 // loop_header_branch
      %14 = sbr.rel (%p12) target = $region8
    $region5: #{tpu_custom_call.1} parent=1 // loop_body
      %s16 = ssub.s32 %s11, 1
      %s17 = ssub.s32 %s11, 2
      %s24 = sadd.s32 1, %s19
      %p25 = scmp.ge.s32.totalorder %s24, 1
      %s26 = scalar_select %p25, 0, %s24
      %s27 = sadd.s32 1, %s18
      %s28 = scalar_select %p25, %s27, %s18
      %p29 = scmp.ge.s32.totalorder %s28, 2
      %s30 = scalar_select %p29, 0, %s28
      %s32 = sadd.s32 %s31, 1
      %p35 = scmp.eq.s32.totalorder %s11, 1
      %p36 = scmp.ne.s32.totalorder %s31, %s33
      %p37 = scmp.eq.s32.totalorder %s11, 0
      %p38 = por %p36, %p37
      %p39 = scmp.ne.s32.totalorder %s31, %s33
      %p40 = scmp.eq.s32.totalorder %s16, 1
      %p41 = por %p39, %p40
      %p42 = scmp.ne.s32.totalorder %s33, %s34
      %p43 = scmp.eq.s32.totalorder %s16, 0
      %p44 = por %p42, %p43
      %p45 = scmp.ne.s32.totalorder %s33, %s34
      %p46 = scmp.eq.s32.totalorder %s17, 1
      %p47 = por %p45, %p46
      %p49 = scmp.ne.s32.totalorder %s34, %s48
      %p50 = scmp.eq.s32.totalorder %s17, 0
      %p51 = por %p49, %p50
      %s52 = ssub.s32 %s18, %s30
      %s53 = ssub.s32 %s19, %s26
      %s54 = sor.u32 %s52, %s53
      %p55 = scmp.eq.s32.totalorder %s54, 0
      %s57 = sadd.s32 %s56, 1
      %s58 = scalar_select %p55, %s56, %s57
      %p61 = pneg %p55
      %p62 = scmp.eq.s32.totalorder %s11, 1
      %p63 = por %p61, %p62
      %p64 = scmp.ne.s32.totalorder %s56, %s59
      %p65 = scmp.eq.s32.totalorder %s11, 0
      %p66 = por %p64, %p65
      %p67 = scmp.ne.s32.totalorder %s56, %s59
      %p68 = scmp.eq.s32.totalorder %s16, 1
      %p69 = por %p67, %p68
      %p70 = scmp.ne.s32.totalorder %s59, %s60
      %p71 = scmp.eq.s32.totalorder %s16, 0
      %p72 = por %p70, %p71
      %p73 = scmp.ne.s32.totalorder %s59, %s60
      %p74 = scmp.eq.s32.totalorder %s17, 1
      %p75 = por %p73, %p74
      %p77 = scmp.ne.s32.totalorder %s60, %s76
      %p78 = scmp.eq.s32.totalorder %s17, 0
      %p79 = por %p77, %p78
      %s80 = ssub.s32 %s18, %s30
      %p81 = scmp.eq.s32.totalorder %s80, 0
      %s83 = sadd.s32 %s82, 1
      %s84 = scalar_select %p81, %s82, %s83
      %p87 = pneg %p81
      %p88 = scmp.eq.s32.totalorder %s11, 1
      %p89 = por %p87, %p88
      %p90 = scmp.ne.s32.totalorder %s82, %s85
      %p91 = scmp.eq.s32.totalorder %s11, 0
      %p92 = por %p90, %p91
      %p93 = scmp.ne.s32.totalorder %s82, %s85
      %p94 = scmp.eq.s32.totalorder %s16, 1
      %p95 = por %p93, %p94
      %p96 = scmp.ne.s32.totalorder %s85, %s86
      %p97 = scmp.eq.s32.totalorder %s16, 0
      %p98 = por %p96, %p97
      %p99 = scmp.ne.s32.totalorder %s85, %s86
      %p100 = scmp.eq.s32.totalorder %s17, 1
      %p101 = por %p99, %p100
      %p103 = scmp.ne.s32.totalorder %s86, %s102
      %p104 = scmp.eq.s32.totalorder %s17, 0
      %p105 = por %p103, %p104
      %p106 = scmp.le.s32.totalorder 1, %s11
      %p107 = scmp.lt.s32.totalorder %s11, 3
      %p108 = pnand %p106, %p107
      %p109 = pneg %p108
      // Predicated region
      $region9: #{tpu_custom_call.1} parent=5 // pred_check
        _
      $region10: #{tpu_custom_call.1} parent=5 // pred_check_branch
        %111 = sbr.rel (%p108) target = $region12
      $region11: #{tpu_custom_call.1} parent=5 // pred_region
        %s112 = ssub.s32 %s11, 1
        // Predicated region
        $region13: #{tpu_custom_call.1} parent=11 // pred_check
          %p113 = pneg %p44
        $region14: #{tpu_custom_call.1} parent=11 // pred_check_branch
          %115 = sbr.rel (%p113) target = $region16
        $region15: #{tpu_custom_call.1} parent=11 // pred_region
          _
        $region16: #{tpu_custom_call.1} parent=11 // pred_fallthru
          _
      $region12: #{tpu_custom_call.1} parent=5 // pred_fallthru
        _
      %p116 = scmp.lt.s32.totalorder %s11, 2
      // Predicated region
      $region17: #{tpu_custom_call.1} parent=5 // pred_check
        %p117 = pneg %p116
      $region18: #{tpu_custom_call.1} parent=5 // pred_check_branch
        %119 = sbr.rel (%p117) target = $region20
      $region19: #{tpu_custom_call.1} parent=5 // pred_region
        // Predicated region
        $region21: #{tpu_custom_call.1} parent=19 // pred_check
          %p120 = pneg %p66
        $region22: #{tpu_custom_call.1} parent=19 // pred_check_branch
          %122 = sbr.rel (%p120) target = $region24
        $region23: #{tpu_custom_call.1} parent=19 // pred_region
          %s123 = smul.u32 2, %s19
          %p124 = scmp.lt.s32.totalorder %s18, 1
          %s125 = scalar_select %p124, %s18, 1
          %p126 = scmp.lt.s32.totalorder %s123, 1
          %s127 = scalar_select %p126, %s123, 1
          %s128 = smul.addr %s125, 2
          %s129 = sadd.s32 %s127, %s128
          %s130 = smul.addr %s129, 4
          %s131 = scalar_lea.vmem %s1, %s130
          %s132 = smul.u32 2, %s19
        $region24: #{tpu_custom_call.1} parent=19 // pred_fallthru
          _
      $region20: #{tpu_custom_call.1} parent=5 // pred_fallthru
        _
      %p133 = scmp.le.s32.totalorder 1, %s11
      %p134 = scmp.lt.s32.totalorder %s11, 3
      %p135 = pnand %p133, %p134
      %p136 = pneg %p135
      // Predicated region
      $region25: #{tpu_custom_call.1} parent=5 // pred_check
        _
      $region26: #{tpu_custom_call.1} parent=5 // pred_check_branch
        %138 = sbr.rel (%p135) target = $region28
      $region27: #{tpu_custom_call.1} parent=5 // pred_region
        %s139 = ssub.s32 %s11, 1
        %p140 = pneg %p44
        %p141 = pneg %p41
        %s142 = smul.u32 2, %s21
        %p143 = scmp.lt.s32.totalorder %s20, 1
        %s144 = scalar_select %p143, %s20, 1
        %p145 = scmp.lt.s32.totalorder %s142, 1
        %s146 = scalar_select %p145, %s142, 1
        %s147 = smul.addr %s144, 2
        %s148 = sadd.s32 %s146, %s147
        %s149 = smul.addr %s148, 4
        %s150 = scalar_lea.vmem %s1, %s149
        %p151 = pneg %p72
        %p152 = pneg %p69
        %p153 = pneg %p98
        %p154 = pneg %p95
        %s155 = sand.u32 %s85, 1
        %s156 = scalar_lea.sflag [#allocation6], %s155
        %s157 = sand.u32 %s85, 1
        %s158 = smul.addr %s157, 192
        %s159 = scalar_lea.vmem [#allocation5], %s158
        %s160 = smul.u32 2, %s21
        %p161 = scmp.lt.s32.totalorder %s20, 1
        %s162 = scalar_select %p161, %s20, 1
        %p163 = scmp.lt.s32.totalorder %s160, 1
        %s164 = scalar_select %p163, %s160, 1
        %s165 = smul.addr %s162, 2
        %s166 = sadd.s32 %s164, %s165
        %s167 = smul.addr %s166, 4
        %s168 = scalar_lea.vmem %s1, %s167
        %s169 = smul.u32 2, %s21
        %p170 = scmp.eq.s32.totalorder %s21, 0
        // Predicated region
        $region29: #{tpu_custom_call.1} parent=27 // pred_check
          %p171 = pneg %p170
        $region30: #{tpu_custom_call.1} parent=27 // pred_check_branch
          %173 = sbr.rel (%p171) target = $region32
        $region31: #{tpu_custom_call.1} parent=27 // pred_region
          %174 = vst [vmem:[#allocation2] sm:$0xff] 0.0
          %175 = vst [vmem:[#allocation2 + $0x8] sm:$0xff] 0.0
          %176 = vst [vmem:[#allocation2 + $0x10] sm:$0xff] 0.0
          %177 = vst [vmem:[#allocation2 + $0x18] sm:$0xff] 0.0
          %178 = vst [vmem:[#allocation2 + $0x20] sm:$0xff] 0.0
          %179 = vst [vmem:[#allocation2 + $0x28] sm:$0xff] 0.0
          %180 = vst [vmem:[#allocation2 + $0x30] sm:$0xff] 0.0
          %181 = vst [vmem:[#allocation2 + $0x38] sm:$0xff] 0.0
          %182 = vst [vmem:[#allocation2 + $0x40] sm:$0xff] 0.0
          %183 = vst [vmem:[#allocation2 + $0x48] sm:$0xff] 0.0
          %184 = vst [vmem:[#allocation2 + $0x50] sm:$0xff] 0.0
          %185 = vst [vmem:[#allocation2 + $0x58] sm:$0xff] 0.0
          %186 = vst [vmem:[#allocation2 + $0x60] sm:$0xff] 0.0
          %187 = vst [vmem:[#allocation2 + $0x68] sm:$0xff] 0.0
          %188 = vst [vmem:[#allocation2 + $0x70] sm:$0xff] 0.0
          %189 = vst [vmem:[#allocation2 + $0x78] sm:$0xff] 0.0
        $region32: #{tpu_custom_call.1} parent=27 // pred_fallthru
          _
        %v190 = vld [vmem:[%s168] sm:$0x77]
        %v191 = vmax.f32 %v190, 0.0
        %v192 = vmin.f32 %v191, 1.0
        %v193 = vadd.f32 %v192, 1e-06
        %v194 = vlog2.pop %v193
        %v195 = vmul.f32 %v194, 0.6931472
        %v196 = vmul.f32 %v192, %v192
        %v198 = vcombine.high %v196, %v196
        %vm200 = vcmask 1042432
        %v201 = vsel %vm200, %v196, 0.0
        %v202 = vrot.slane %v201, 4
        %v203 = vadd.f32 %v201, %v202
        %v204 = vrot.slane %v203, 2
        %v205 = vadd.f32 %v203, %v204
        %v206 = vrot.slane %v205, 1
        %v207 = vadd.f32 %v205, %v206
        %v208 = vsel %vm200, %v198, 0.0
        %v209 = vrot.slane %v208, 4
        %v210 = vadd.f32 %v208, %v209
        %v211 = vrot.slane %v210, 2
        %v212 = vadd.f32 %v210, %v211
        %v213 = vrot.slane %v212, 1
        %v214 = vadd.f32 %v212, %v213
        %v215 = vadd.f32 %v207, 1e-06
        %v216 = vadd.f32 %v214, 1e-06
        %v217 = vrsqrt.pop %v215
        %v218 = vmul.f32 %v215, %v217
        %vm219 = vcmp.eq.f32.partialorder %v215, inf
        %v220 = vsel %vm219, %v215, %v218
        %vm221 = vcmp.eq.f32.partialorder %v215, 0.0
        %v222 = vand.u32 %v215, 2147483648
        %v223 = vsel %vm221, %v222, %v220
        %v224 = vrsqrt.pop %v216
        %v225 = vmul.f32 %v216, %v224
        %vm226 = vcmp.eq.f32.partialorder %v216, inf
        %v227 = vsel %vm226, %v216, %v225
        %vm228 = vcmp.eq.f32.partialorder %v216, 0.0
        %v229 = vand.u32 %v216, 2147483648
        %v230 = vsel %vm228, %v229, %v227
        %v231 = vld [vmem:[%s0] sm:$0xff]
        %v232 = vld [vmem:[%s0 + $0x8] sm:$0xff]
        %v233 = vld [vmem:[%s0 + $0x10] sm:$0xff]
        %v234 = vld [vmem:[%s0 + $0x18] sm:$0xff]
        %v235 = vld [vmem:[%s0 + $0x20] sm:$0xff]
        %v236 = vld [vmem:[%s0 + $0x28] sm:$0xff]
        %v237 = vld [vmem:[%s0 + $0x30] sm:$0xff]
        %v238 = vld [vmem:[%s0 + $0x38] sm:$0xff]
        %v240 = vrot.slane %v195, 5
        %v241 = vrot.slane %v240, 4
        %v243 = vsub.f32 %v195, %v241
        %v244 = vmul.f32 %v243, 50.0
        %v246 = vlaneseq
        %v247 = vshrl.u32 %v246, 7
        %v248 = vsub.s32 0, %v247
        %v249 = vrot.slane %v244, %v248
        %v250 = vlaneseq
        %v251 = vshrl.u32 %v250, 7
        %v252 = vsub.s32 4, %v251
        %v253 = vrot.slane %v244, %v252
        %v256 = vlaneseq
        %v257 = vshrl.u32 %v256, 7
        %v258 = vsub.s32 0, %v257
        %v259 = vrot.slane %v249, %v258
        %v260 = vlaneseq
        %v261 = vshrl.u32 %v260, 7
        %v262 = vsub.s32 0, %v261
        %v263 = vrot.slane %v253, %v262
        %265 = vset.pattern.permute.xlu0 0
        %266 = vperm.xlu0 %265, %v231
        %v267 = vpop.permute.xlu0 %266
        %270 = vset.pattern.permute.xlu0 0
        %271 = vperm.xlu0 %270, %v232
        %v272 = vpop.permute.xlu0 %271
        %275 = vset.pattern.permute.xlu0 0
        %276 = vperm.xlu0 %275, %v233
        %v277 = vpop.permute.xlu0 %276
        %280 = vset.pattern.permute.xlu0 0
        %281 = vperm.xlu0 %280, %v234
        %v282 = vpop.permute.xlu0 %281
        %285 = vset.pattern.permute.xlu0 0
        %286 = vperm.xlu0 %285, %v235
        %v287 = vpop.permute.xlu0 %286
        %290 = vset.pattern.permute.xlu0 0
        %291 = vperm.xlu0 %290, %v236
        %v292 = vpop.permute.xlu0 %291
        %295 = vset.pattern.permute.xlu0 0
        %296 = vperm.xlu0 %295, %v237
        %v297 = vpop.permute.xlu0 %296
        %300 = vset.pattern.permute.xlu0 0
        %301 = vperm.xlu0 %300, %v238
        %v302 = vpop.permute.xlu0 %301
        %v304 = vsub.f32 %v259, %v267
        %v305 = vsub.f32 %v263, %v267
        %v306 = vsub.f32 %v259, %v272
        %v307 = vsub.f32 %v263, %v272
        %v308 = vsub.f32 %v259, %v277
        %v309 = vsub.f32 %v263, %v277
        %v310 = vsub.f32 %v259, %v282
        %v311 = vsub.f32 %v263, %v282
        %v312 = vsub.f32 %v259, %v287
        %v313 = vsub.f32 %v263, %v287
        %v314 = vsub.f32 %v259, %v292
        %v315 = vsub.f32 %v263, %v292
        %v316 = vsub.f32 %v259, %v297
        %v317 = vsub.f32 %v263, %v297
        %v318 = vsub.f32 %v259, %v302
        %v319 = vsub.f32 %v263, %v302
        %v320 = vmul.f32 %v304, %v304
        %v321 = vmul.f32 %v305, %v305
        %v322 = vmul.f32 %v306, %v306
        %v323 = vmul.f32 %v307, %v307
        %v324 = vmul.f32 %v308, %v308
        %v325 = vmul.f32 %v309, %v309
        %v326 = vmul.f32 %v310, %v310
        %v327 = vmul.f32 %v311, %v311
        %v328 = vmul.f32 %v312, %v312
        %v329 = vmul.f32 %v313, %v313
        %v330 = vmul.f32 %v314, %v314
        %v331 = vmul.f32 %v315, %v315
        %v332 = vmul.f32 %v316, %v316
        %v333 = vmul.f32 %v317, %v317
        %v334 = vmul.f32 %v318, %v318
        %v335 = vmul.f32 %v319, %v319
        %v336 = vadd.f32 %v320, 1.0
        %v337 = vadd.f32 %v321, 1.0
        %v338 = vadd.f32 %v322, 1.0
        %v339 = vadd.f32 %v323, 1.0
        %v340 = vadd.f32 %v324, 1.0
        %v341 = vadd.f32 %v325, 1.0
        %v342 = vadd.f32 %v326, 1.0
        %v343 = vadd.f32 %v327, 1.0
        %v344 = vadd.f32 %v328, 1.0
        %v345 = vadd.f32 %v329, 1.0
        %v346 = vadd.f32 %v330, 1.0
        %v347 = vadd.f32 %v331, 1.0
        %v348 = vadd.f32 %v332, 1.0
        %v349 = vadd.f32 %v333, 1.0
        %v350 = vadd.f32 %v334, 1.0
        %v351 = vadd.f32 %v335, 1.0
        %v352 = vrcp.pop %v336
        %v353 = vmul.f32 1.0, %v352
        %v354 = vrcp.pop %v337
        %v355 = vmul.f32 1.0, %v354
        %v356 = vrcp.pop %v338
        %v357 = vmul.f32 1.0, %v356
        %v358 = vrcp.pop %v339
        %v359 = vmul.f32 1.0, %v358
        %v360 = vrcp.pop %v340
        %v361 = vmul.f32 1.0, %v360
        %v362 = vrcp.pop %v341
        %v363 = vmul.f32 1.0, %v362
        %v364 = vrcp.pop %v342
        %v365 = vmul.f32 1.0, %v364
        %v366 = vrcp.pop %v343
        %v367 = vmul.f32 1.0, %v366
        %v368 = vrcp.pop %v344
        %v369 = vmul.f32 1.0, %v368
        %v370 = vrcp.pop %v345
        %v371 = vmul.f32 1.0, %v370
        %v372 = vrcp.pop %v346
        %v373 = vmul.f32 1.0, %v372
        %v374 = vrcp.pop %v347
        %v375 = vmul.f32 1.0, %v374
        %v376 = vrcp.pop %v348
        %v377 = vmul.f32 1.0, %v376
        %v378 = vrcp.pop %v349
        %v379 = vmul.f32 1.0, %v378
        %v380 = vrcp.pop %v350
        %v381 = vmul.f32 1.0, %v380
        %v382 = vrcp.pop %v351
        %v383 = vmul.f32 1.0, %v382
        %v384 = vrot.slane %v195, 6
        %v385 = vrot.slane %v384, 4
        %v387 = vsub.f32 %v195, %v385
        %v388 = vmul.f32 %v387, 50.0
        %v390 = vlaneseq
        %v391 = vshrl.u32 %v390, 7
        %v392 = vsub.s32 0, %v391
        %v393 = vrot.slane %v388, %v392
        %v394 = vlaneseq
        %v395 = vshrl.u32 %v394, 7
        %v396 = vsub.s32 4, %v395
        %v397 = vrot.slane %v388, %v396
        %v400 = vlaneseq
        %v401 = vshrl.u32 %v400, 7
        %v402 = vsub.s32 0, %v401
        %v403 = vrot.slane %v393, %v402
        %v404 = vlaneseq
        %v405 = vshrl.u32 %v404, 7
        %v406 = vsub.s32 0, %v405
        %v407 = vrot.slane %v397, %v406
        %v408 = vsub.f32 %v403, %v267
        %v409 = vsub.f32 %v407, %v267
        %v410 = vsub.f32 %v403, %v272
        %v411 = vsub.f32 %v407, %v272
        %v412 = vsub.f32 %v403, %v277
        %v413 = vsub.f32 %v407, %v277
        %v414 = vsub.f32 %v403, %v282
        %v415 = vsub.f32 %v407, %v282
        %v416 = vsub.f32 %v403, %v287
        %v417 = vsub.f32 %v407, %v287
        %v418 = vsub.f32 %v403, %v292
        %v419 = vsub.f32 %v407, %v292
        %v420 = vsub.f32 %v403, %v297
        %v421 = vsub.f32 %v407, %v297
        %v422 = vsub.f32 %v403, %v302
        %v423 = vsub.f32 %v407, %v302
        %v424 = vmul.f32 %v408, %v408
        %v425 = vmul.f32 %v409, %v409
        %v426 = vmul.f32 %v410, %v410
        %v427 = vmul.f32 %v411, %v411
        %v428 = vmul.f32 %v412, %v412
        %v429 = vmul.f32 %v413, %v413
        %v430 = vmul.f32 %v414, %v414
        %v431 = vmul.f32 %v415, %v415
        %v432 = vmul.f32 %v416, %v416
        %v433 = vmul.f32 %v417, %v417
        %v434 = vmul.f32 %v418, %v418
        %v435 = vmul.f32 %v419, %v419
        %v436 = vmul.f32 %v420, %v420
        %v437 = vmul.f32 %v421, %v421
        %v438 = vmul.f32 %v422, %v422
        %v439 = vmul.f32 %v423, %v423
        %v440 = vadd.f32 %v424, 1.0
        %v441 = vadd.f32 %v425, 1.0
        %v442 = vadd.f32 %v426, 1.0
        %v443 = vadd.f32 %v427, 1.0
        %v444 = vadd.f32 %v428, 1.0
        %v445 = vadd.f32 %v429, 1.0
        %v446 = vadd.f32 %v430, 1.0
        %v447 = vadd.f32 %v431, 1.0
        %v448 = vadd.f32 %v432, 1.0
        %v449 = vadd.f32 %v433, 1.0
        %v450 = vadd.f32 %v434, 1.0
        %v451 = vadd.f32 %v435, 1.0
        %v452 = vadd.f32 %v436, 1.0
        %v453 = vadd.f32 %v437, 1.0
        %v454 = vadd.f32 %v438, 1.0
        %v455 = vadd.f32 %v439, 1.0
        %v456 = vrcp.pop %v440
        %v457 = vmul.f32 1.0, %v456
        %v458 = vrcp.pop %v441
        %v459 = vmul.f32 1.0, %v458
        %v460 = vrcp.pop %v442
        %v461 = vmul.f32 1.0, %v460
        %v462 = vrcp.pop %v443
        %v463 = vmul.f32 1.0, %v462
        %v464 = vrcp.pop %v444
        %v465 = vmul.f32 1.0, %v464
        %v466 = vrcp.pop %v445
        %v467 = vmul.f32 1.0, %v466
        %v468 = vrcp.pop %v446
        %v469 = vmul.f32 1.0, %v468
        %v470 = vrcp.pop %v447
        %v471 = vmul.f32 1.0, %v470
        %v472 = vrcp.pop %v448
        %v473 = vmul.f32 1.0, %v472
        %v474 = vrcp.pop %v449
        %v475 = vmul.f32 1.0, %v474
        %v476 = vrcp.pop %v450
        %v477 = vmul.f32 1.0, %v476
        %v478 = vrcp.pop %v451
        %v479 = vmul.f32 1.0, %v478
        %v480 = vrcp.pop %v452
        %v481 = vmul.f32 1.0, %v480
        %v482 = vrcp.pop %v453
        %v483 = vmul.f32 1.0, %v482
        %v484 = vrcp.pop %v454
        %v485 = vmul.f32 1.0, %v484
        %v486 = vrcp.pop %v455
        %v487 = vmul.f32 1.0, %v486
        %v488 = vlaneseq
        %v489 = vshrl.u32 %v488, 7
        %v490 = vsub.s32 1, %v489
        %v491 = vrot.slane %v244, %v490
        %v492 = vlaneseq
        %v493 = vshrl.u32 %v492, 7
        %v494 = vsub.s32 5, %v493
        %v495 = vrot.slane %v244, %v494
        %v498 = vlaneseq
        %v499 = vshrl.u32 %v498, 7
        %v500 = vsub.s32 1, %v499
        %v501 = vrot.slane %v491, %v500
        %v502 = vlaneseq
        %v503 = vshrl.u32 %v502, 7
        %v504 = vsub.s32 1, %v503
        %v505 = vrot.slane %v495, %v504
        %v506 = vsub.f32 %v501, %v267
        %v507 = vsub.f32 %v505, %v267
        %v508 = vsub.f32 %v501, %v272
        %v509 = vsub.f32 %v505, %v272
        %v510 = vsub.f32 %v501, %v277
        %v511 = vsub.f32 %v505, %v277
        %v512 = vsub.f32 %v501, %v282
        %v513 = vsub.f32 %v505, %v282
        %v514 = vsub.f32 %v501, %v287
        %v515 = vsub.f32 %v505, %v287
        %v516 = vsub.f32 %v501, %v292
        %v517 = vsub.f32 %v505, %v292
        %v518 = vsub.f32 %v501, %v297
        %v519 = vsub.f32 %v505, %v297
        %v520 = vsub.f32 %v501, %v302
        %v521 = vsub.f32 %v505, %v302
        %v522 = vmul.f32 %v506, %v506
        %v523 = vmul.f32 %v507, %v507
        %v524 = vmul.f32 %v508, %v508
        %v525 = vmul.f32 %v509, %v509
        %v526 = vmul.f32 %v510, %v510
        %v527 = vmul.f32 %v511, %v511
        %v528 = vmul.f32 %v512, %v512
        %v529 = vmul.f32 %v513, %v513
        %v530 = vmul.f32 %v514, %v514
        %v531 = vmul.f32 %v515, %v515
        %v532 = vmul.f32 %v516, %v516
        %v533 = vmul.f32 %v517, %v517
        %v534 = vmul.f32 %v518, %v518
        %v535 = vmul.f32 %v519, %v519
        %v536 = vmul.f32 %v520, %v520
        %v537 = vmul.f32 %v521, %v521
        %v538 = vadd.f32 %v522, 1.0
        %v539 = vadd.f32 %v523, 1.0
        %v540 = vadd.f32 %v524, 1.0
        %v541 = vadd.f32 %v525, 1.0
        %v542 = vadd.f32 %v526, 1.0
        %v543 = vadd.f32 %v527, 1.0
        %v544 = vadd.f32 %v528, 1.0
        %v545 = vadd.f32 %v529, 1.0
        %v546 = vadd.f32 %v530, 1.0
        %v547 = vadd.f32 %v531, 1.0
        %v548 = vadd.f32 %v532, 1.0
        %v549 = vadd.f32 %v533, 1.0
        %v550 = vadd.f32 %v534, 1.0
        %v551 = vadd.f32 %v535, 1.0
        %v552 = vadd.f32 %v536, 1.0
        %v553 = vadd.f32 %v537, 1.0
        %v554 = vrcp.pop %v538
        %v555 = vmul.f32 1.0, %v554
        %v556 = vrcp.pop %v539
        %v557 = vmul.f32 1.0, %v556
        %v558 = vrcp.pop %v540
        %v559 = vmul.f32 1.0, %v558
        %v560 = vrcp.pop %v541
        %v561 = vmul.f32 1.0, %v560
        %v562 = vrcp.pop %v542
        %v563 = vmul.f32 1.0, %v562
        %v564 = vrcp.pop %v543
        %v565 = vmul.f32 1.0, %v564
        %v566 = vrcp.pop %v544
        %v567 = vmul.f32 1.0, %v566
        %v568 = vrcp.pop %v545
        %v569 = vmul.f32 1.0, %v568
        %v570 = vrcp.pop %v546
        %v571 = vmul.f32 1.0, %v570
        %v572 = vrcp.pop %v547
        %v573 = vmul.f32 1.0, %v572
        %v574 = vrcp.pop %v548
        %v575 = vmul.f32 1.0, %v574
        %v576 = vrcp.pop %v549
        %v577 = vmul.f32 1.0, %v576
        %v578 = vrcp.pop %v550
        %v579 = vmul.f32 1.0, %v578
        %v580 = vrcp.pop %v551
        %v581 = vmul.f32 1.0, %v580
        %v582 = vrcp.pop %v552
        %v583 = vmul.f32 1.0, %v582
        %v584 = vrcp.pop %v553
        %v585 = vmul.f32 1.0, %v584
        %586 = vst [vmem:[#allocation4] sm:$0xff] %v457
        %587 = vst [vmem:[#allocation4 + $0x8] sm:$0xff] %v459
        %588 = vst [vmem:[#allocation4 + $0x10] sm:$0xff] %v461
        %589 = vst [vmem:[#allocation4 + $0x18] sm:$0xff] %v463
        %590 = vst [vmem:[#allocation4 + $0x20] sm:$0xff] %v465
        %591 = vst [vmem:[#allocation4 + $0x28] sm:$0xff] %v467
        %592 = vst [vmem:[#allocation4 + $0x30] sm:$0xff] %v469
        %593 = vst [vmem:[#allocation4 + $0x38] sm:$0xff] %v471
        %594 = vst [vmem:[#allocation4 + $0x40] sm:$0xff] %v473
        %595 = vst [vmem:[#allocation4 + $0x48] sm:$0xff] %v475
        %596 = vst [vmem:[#allocation4 + $0x50] sm:$0xff] %v477
        %597 = vst [vmem:[#allocation4 + $0x58] sm:$0xff] %v479
        %598 = vst [vmem:[#allocation4 + $0x60] sm:$0xff] %v481
        %599 = vst [vmem:[#allocation4 + $0x68] sm:$0xff] %v483
        %600 = vst [vmem:[#allocation4 + $0x70] sm:$0xff] %v485
        %601 = vst [vmem:[#allocation4 + $0x78] sm:$0xff] %v487
        %602 = vst [vmem:[#allocation4 + $0x80] sm:$0xff] %v555
        %603 = vst [vmem:[#allocation4 + $0x88] sm:$0xff] %v557
        %604 = vst [vmem:[#allocation4 + $0x90] sm:$0xff] %v559
        %605 = vst [vmem:[#allocation4 + $0x98] sm:$0xff] %v561
        %606 = vst [vmem:[#allocation4 + $0xa0] sm:$0xff] %v563
        %607 = vst [vmem:[#allocation4 + $0xa8] sm:$0xff] %v565
        %608 = vst [vmem:[#allocation4 + $0xb0] sm:$0xff] %v567
        %609 = vst [vmem:[#allocation4 + $0xb8] sm:$0xff] %v569
        %610 = vst [vmem:[#allocation4 + $0xc0] sm:$0xff] %v571
        %611 = vst [vmem:[#allocation4 + $0xc8] sm:$0xff] %v573
        %612 = vst [vmem:[#allocation4 + $0xd0] sm:$0xff] %v575
        %613 = vst [vmem:[#allocation4 + $0xd8] sm:$0xff] %v577
        %614 = vst [vmem:[#allocation4 + $0xe0] sm:$0xff] %v579
        %615 = vst [vmem:[#allocation4 + $0xe8] sm:$0xff] %v581
        %616 = vst [vmem:[#allocation4 + $0xf0] sm:$0xff] %v583
        %617 = vst [vmem:[#allocation4 + $0xf8] sm:$0xff] %v585
        %v618 = vmul.f32 %v223, %v353
        %v619 = vmul.f32 %v230, %v355
        %v620 = vmul.f32 %v223, %v357
        %v621 = vmul.f32 %v230, %v359
        %v622 = vmul.f32 %v223, %v361
        %v623 = vmul.f32 %v230, %v363
        %v624 = vmul.f32 %v223, %v365
        %v625 = vmul.f32 %v230, %v367
        %v626 = vmul.f32 %v223, %v369
        %v627 = vmul.f32 %v230, %v371
        %v628 = vmul.f32 %v223, %v373
        %v629 = vmul.f32 %v230, %v375
        %v630 = vmul.f32 %v223, %v377
        %v631 = vmul.f32 %v230, %v379
        %v632 = vmul.f32 %v223, %v381
        %v633 = vmul.f32 %v230, %v383
        %634 = vst [vmem:[#allocation3] sm:$0xff] %v618
        %635 = vst [vmem:[#allocation3 + $0x8] sm:$0xff] %v619
        %636 = vst [vmem:[#allocation3 + $0x10] sm:$0xff] %v620
        %637 = vst [vmem:[#allocation3 + $0x18] sm:$0xff] %v621
        %638 = vst [vmem:[#allocation3 + $0x20] sm:$0xff] %v622
        %639 = vst [vmem:[#allocation3 + $0x28] sm:$0xff] %v623
        %640 = vst [vmem:[#allocation3 + $0x30] sm:$0xff] %v624
        %641 = vst [vmem:[#allocation3 + $0x38] sm:$0xff] %v625
        %642 = vst [vmem:[#allocation3 + $0x40] sm:$0xff] %v626
        %643 = vst [vmem:[#allocation3 + $0x48] sm:$0xff] %v627
        %644 = vst [vmem:[#allocation3 + $0x50] sm:$0xff] %v628
        %645 = vst [vmem:[#allocation3 + $0x58] sm:$0xff] %v629
        %646 = vst [vmem:[#allocation3 + $0x60] sm:$0xff] %v630
        %647 = vst [vmem:[#allocation3 + $0x68] sm:$0xff] %v631
        %648 = vst [vmem:[#allocation3 + $0x70] sm:$0xff] %v632
        %649 = vst [vmem:[#allocation3 + $0x78] sm:$0xff] %v633
        %v650 = vmul.f32 %v223, %v457
        %v651 = vmul.f32 %v230, %v459
        %v652 = vmul.f32 %v223, %v461
        %v653 = vmul.f32 %v230, %v463
        %v654 = vmul.f32 %v223, %v465
        %v655 = vmul.f32 %v230, %v467
        %v656 = vmul.f32 %v223, %v469
        %v657 = vmul.f32 %v230, %v471
        %v658 = vmul.f32 %v223, %v473
        %v659 = vmul.f32 %v230, %v475
        %v660 = vmul.f32 %v223, %v477
        %v661 = vmul.f32 %v230, %v479
        %v662 = vmul.f32 %v223, %v481
        %v663 = vmul.f32 %v230, %v483
        %v664 = vmul.f32 %v223, %v485
        %v665 = vmul.f32 %v230, %v487
        %666 = vst [vmem:[#allocation3 + $0x80] sm:$0xff] %v650
        %667 = vst [vmem:[#allocation3 + $0x88] sm:$0xff] %v651
        %668 = vst [vmem:[#allocation3 + $0x90] sm:$0xff] %v652
        %669 = vst [vmem:[#allocation3 + $0x98] sm:$0xff] %v653
        %670 = vst [vmem:[#allocation3 + $0xa0] sm:$0xff] %v654
        %671 = vst [vmem:[#allocation3 + $0xa8] sm:$0xff] %v655
        %672 = vst [vmem:[#allocation3 + $0xb0] sm:$0xff] %v656
        %673 = vst [vmem:[#allocation3 + $0xb8] sm:$0xff] %v657
        %674 = vst [vmem:[#allocation3 + $0xc0] sm:$0xff] %v658
        %675 = vst [vmem:[#allocation3 + $0xc8] sm:$0xff] %v659
        %676 = vst [vmem:[#allocation3 + $0xd0] sm:$0xff] %v660
        %677 = vst [vmem:[#allocation3 + $0xd8] sm:$0xff] %v661
        %678 = vst [vmem:[#allocation3 + $0xe0] sm:$0xff] %v662
        %679 = vst [vmem:[#allocation3 + $0xe8] sm:$0xff] %v663
        %680 = vst [vmem:[#allocation3 + $0xf0] sm:$0xff] %v664
        %681 = vst [vmem:[#allocation3 + $0xf8] sm:$0xff] %v665
        %v682 = vld [vmem:[#allocation2] sm:$0xff]
        %v683 = vld [vmem:[#allocation2 + $0x8] sm:$0xff]
        %v684 = vld [vmem:[#allocation2 + $0x10] sm:$0xff]
        %v685 = vld [vmem:[#allocation2 + $0x18] sm:$0xff]
        %v686 = vld [vmem:[#allocation2 + $0x20] sm:$0xff]
        %v687 = vld [vmem:[#allocation2 + $0x28] sm:$0xff]
        %v688 = vld [vmem:[#allocation2 + $0x30] sm:$0xff]
        %v689 = vld [vmem:[#allocation2 + $0x38] sm:$0xff]
        %v690 = vld [vmem:[#allocation2 + $0x40] sm:$0xff]
        %v691 = vld [vmem:[#allocation2 + $0x48] sm:$0xff]
        %v692 = vld [vmem:[#allocation2 + $0x50] sm:$0xff]
        %v693 = vld [vmem:[#allocation2 + $0x58] sm:$0xff]
        %v694 = vld [vmem:[#allocation2 + $0x60] sm:$0xff]
        %v695 = vld [vmem:[#allocation2 + $0x68] sm:$0xff]
        %v696 = vld [vmem:[#allocation2 + $0x70] sm:$0xff]
        %v697 = vld [vmem:[#allocation2 + $0x78] sm:$0xff]
        %v698 = vld [vmem:[#allocation3] sm:$0xff]
        %v699 = vld [vmem:[#allocation3 + $0x8] sm:$0xff]
        %v700 = vld [vmem:[#allocation3 + $0x10] sm:$0xff]
        %v701 = vld [vmem:[#allocation3 + $0x18] sm:$0xff]
        %v702 = vld [vmem:[#allocation3 + $0x20] sm:$0xff]
        %v703 = vld [vmem:[#allocation3 + $0x28] sm:$0xff]
        %v704 = vld [vmem:[#allocation3 + $0x30] sm:$0xff]
        %v705 = vld [vmem:[#allocation3 + $0x38] sm:$0xff]
        %v706 = vld [vmem:[#allocation3 + $0x40] sm:$0xff]
        %v707 = vld [vmem:[#allocation3 + $0x48] sm:$0xff]
        %v708 = vld [vmem:[#allocation3 + $0x50] sm:$0xff]
        %v709 = vld [vmem:[#allocation3 + $0x58] sm:$0xff]
        %v710 = vld [vmem:[#allocation3 + $0x60] sm:$0xff]
        %v711 = vld [vmem:[#allocation3 + $0x68] sm:$0xff]
        %v712 = vld [vmem:[#allocation3 + $0x70] sm:$0xff]
        %v713 = vld [vmem:[#allocation3 + $0x78] sm:$0xff]
        %v714 = vld [vmem:[#allocation3 + $0x80] sm:$0xff]
        %v715 = vld [vmem:[#allocation3 + $0x88] sm:$0xff]
        %v716 = vld [vmem:[#allocation3 + $0x90] sm:$0xff]
        %v717 = vld [vmem:[#allocation3 + $0x98] sm:$0xff]
        %v718 = vld [vmem:[#allocation3 + $0xa0] sm:$0xff]
        %v719 = vld [vmem:[#allocation3 + $0xa8] sm:$0xff]
        %v720 = vld [vmem:[#allocation3 + $0xb0] sm:$0xff]
        %v721 = vld [vmem:[#allocation3 + $0xb8] sm:$0xff]
        %v722 = vld [vmem:[#allocation3 + $0xc0] sm:$0xff]
        %v723 = vld [vmem:[#allocation3 + $0xc8] sm:$0xff]
        %v724 = vld [vmem:[#allocation3 + $0xd0] sm:$0xff]
        %v725 = vld [vmem:[#allocation3 + $0xd8] sm:$0xff]
        %v726 = vld [vmem:[#allocation3 + $0xe0] sm:$0xff]
        %v727 = vld [vmem:[#allocation3 + $0xe8] sm:$0xff]
        %v728 = vld [vmem:[#allocation3 + $0xf0] sm:$0xff]
        %v729 = vld [vmem:[#allocation3 + $0xf8] sm:$0xff]
        %v730 = vld [vmem:[#allocation4] sm:$0xff]
        %v731 = vld [vmem:[#allocation4 + $0x8] sm:$0xff]
        %v732 = vld [vmem:[#allocation4 + $0x10] sm:$0xff]
        %v733 = vld [vmem:[#allocation4 + $0x18] sm:$0xff]
        %v734 = vld [vmem:[#allocation4 + $0x20] sm:$0xff]
        %v735 = vld [vmem:[#allocation4 + $0x28] sm:$0xff]
        %v736 = vld [vmem:[#allocation4 + $0x30] sm:$0xff]
        %v737 = vld [vmem:[#allocation4 + $0x38] sm:$0xff]
        %v738 = vld [vmem:[#allocation4 + $0x40] sm:$0xff]
        %v739 = vld [vmem:[#allocation4 + $0x48] sm:$0xff]
        %v740 = vld [vmem:[#allocation4 + $0x50] sm:$0xff]
        %v741 = vld [vmem:[#allocation4 + $0x58] sm:$0xff]
        %v742 = vld [vmem:[#allocation4 + $0x60] sm:$0xff]
        %v743 = vld [vmem:[#allocation4 + $0x68] sm:$0xff]
        %v744 = vld [vmem:[#allocation4 + $0x70] sm:$0xff]
        %v745 = vld [vmem:[#allocation4 + $0x78] sm:$0xff]
        %v746 = vld [vmem:[#allocation4 + $0x80] sm:$0xff]
        %v747 = vld [vmem:[#allocation4 + $0x88] sm:$0xff]
        %v748 = vld [vmem:[#allocation4 + $0x90] sm:$0xff]
        %v749 = vld [vmem:[#allocation4 + $0x98] sm:$0xff]
        %v750 = vld [vmem:[#allocation4 + $0xa0] sm:$0xff]
        %v751 = vld [vmem:[#allocation4 + $0xa8] sm:$0xff]
        %v752 = vld [vmem:[#allocation4 + $0xb0] sm:$0xff]
        %v753 = vld [vmem:[#allocation4 + $0xb8] sm:$0xff]
        %v754 = vld [vmem:[#allocation4 + $0xc0] sm:$0xff]
        %v755 = vld [vmem:[#allocation4 + $0xc8] sm:$0xff]
        %v756 = vld [vmem:[#allocation4 + $0xd0] sm:$0xff]
        %v757 = vld [vmem:[#allocation4 + $0xd8] sm:$0xff]
        %v758 = vld [vmem:[#allocation4 + $0xe0] sm:$0xff]
        %v759 = vld [vmem:[#allocation4 + $0xe8] sm:$0xff]
        %v760 = vld [vmem:[#allocation4 + $0xf0] sm:$0xff]
        %v761 = vld [vmem:[#allocation4 + $0xf8] sm:$0xff]
        %762 = vmatprep.subr.mxu0 %v731
        %763 = vmatpush1.xpose.msra.mxu0 %v730
        %764 = vmatprep.subr.mxu0 %v733
        %765 = vmatpush1.xpose.msra.mxu0 %v732
        %766 = vmatprep.subr.mxu0 %v735
        %767 = vmatpush1.xpose.msra.mxu0 %v734
        %768 = vmatprep.subr.mxu0 %v737
        %769 = vmatpush1.xpose.msra.mxu0 %v736
        %770 = vmatprep.subr.mxu0 %v739
        %771 = vmatpush1.xpose.msra.mxu0 %v738
        %772 = vmatprep.subr.mxu0 %v741
        %773 = vmatpush1.xpose.msra.mxu0 %v740
        %774 = vmatprep.subr.mxu0 %v743
        %775 = vmatpush1.xpose.msra.mxu0 %v742
        %776 = vmatprep.subr.mxu0 %v745
        %777 = vmatpush1.xpose.msra.mxu0 %v744
        %778 = vmatprep.subr.mxu0 %v747
        %779 = vmatpush1.xpose.msra.mxu0 %v746
        %780 = vmatprep.subr.mxu0 %v749
        %781 = vmatpush1.xpose.msra.mxu0 %v748
        %782 = vmatprep.subr.mxu0 %v751
        %783 = vmatpush1.xpose.msra.mxu0 %v750
        %784 = vmatprep.subr.mxu0 %v753
        %785 = vmatpush1.xpose.msra.mxu0 %v752
        %786 = vmatprep.subr.mxu0 %v755
        %787 = vmatpush1.xpose.msra.mxu0 %v754
        %788 = vmatprep.subr.mxu0 %v757
        %789 = vmatpush1.xpose.msra.mxu0 %v756
        %790 = vmatprep.subr.mxu0 %v759
        %791 = vmatpush1.xpose.msra.mxu0 %v758
        %792 = vmatprep.subr.mxu0 %v761
        %793 = vmatpush1.xpose.msra.mxu0 %v760
        %794 = vmatprep.subr.mxu0 0.0
        %795 = vmatpush1.xpose.msra.mxu0 0.0
        %796 = vmatprep.subr.mxu0 0.0
        %797 = vmatpush1.xpose.msra.mxu0 0.0
        %798 = vmatprep.subr.mxu0 0.0
        %799 = vmatpush1.xpose.msra.mxu0 0.0
        %800 = vmatprep.subr.mxu0 0.0
        %801 = vmatpush1.xpose.msra.mxu0 0.0
        %802 = vmatprep.subr.mxu0 0.0
        %803 = vmatpush1.xpose.msra.mxu0 0.0
        %804 = vmatprep.subr.mxu0 0.0
        %805 = vmatpush1.xpose.msra.mxu0 0.0
        %806 = vmatprep.subr.mxu0 0.0
        %807 = vmatpush1.xpose.msra.mxu0 0.0
        %808 = vmatprep.subr.mxu0 0.0
        %809 = vmatpush1.xpose.msra.mxu0 0.0
        %810 = vmatprep.subr.mxu0 0.0
        %811 = vmatpush1.xpose.msra.mxu0 0.0
        %812 = vmatprep.subr.mxu0 0.0
        %813 = vmatpush1.xpose.msra.mxu0 0.0
        %814 = vmatprep.subr.mxu0 0.0
        %815 = vmatpush1.xpose.msra.mxu0 0.0
        %816 = vmatprep.subr.mxu0 0.0
        %817 = vmatpush1.xpose.msra.mxu0 0.0
        %818 = vmatprep.subr.mxu0 0.0
        %819 = vmatpush1.xpose.msra.mxu0 0.0
        %820 = vmatprep.subr.mxu0 0.0
        %821 = vmatpush1.xpose.msra.mxu0 0.0
        %822 = vmatprep.subr.mxu0 0.0
        %823 = vmatpush1.xpose.msra.mxu0 0.0
        %824 = vmatprep.subr.mxu0 0.0
        %825 = vmatpush1.xpose.msra.mxu0 0.0
        %826 = vmatprep.mubr.f32.mxu0 %v699
        %827 = vmatmul.mubr.f32.gmra.mrb[0].mxu0 %v698
        %v828 = vpop.f32.mrb[0].mxu0
        %v829 = vadd.f32 0.0, %v828
        %v830 = vpop.f32.mrb[0].mxu0
        %831 = vmatprep.mubr.f32.mxu0 %v701
        %832 = vmatmul.mubr.f32.gmra.mrb[0].mxu0 %v700
        %v833 = vpop.f32.mrb[0].mxu0
        %v834 = vadd.f32 0.0, %v833
        %v835 = vpop.f32.mrb[0].mxu0
        %836 = vmatprep.mubr.f32.mxu0 %v703
        %837 = vmatmul.mubr.f32.gmra.mrb[0].mxu0 %v702
        %v838 = vpop.f32.mrb[0].mxu0
        %v839 = vadd.f32 0.0, %v838
        %v840 = vpop.f32.mrb[0].mxu0
        %841 = vmatprep.mubr.f32.mxu0 %v705
        %842 = vmatmul.mubr.f32.gmra.mrb[0].mxu0 %v704
        %v843 = vpop.f32.mrb[0].mxu0
        %v844 = vadd.f32 0.0, %v843
        %v845 = vpop.f32.mrb[0].mxu0
        %846 = vmatprep.mubr.f32.mxu0 %v707
        %847 = vmatmul.mubr.f32.gmra.mrb[0].mxu0 %v706
        %v848 = vpop.f32.mrb[0].mxu0
        %v849 = vadd.f32 0.0, %v848
        %v850 = vpop.f32.mrb[0].mxu0
        %851 = vmatprep.mubr.f32.mxu0 %v709
        %852 = vmatmul.mubr.f32.gmra.mrb[0].mxu0 %v708
        %v853 = vpop.f32.mrb[0].mxu0
        %v854 = vadd.f32 0.0, %v853
        %v855 = vpop.f32.mrb[0].mxu0
        %856 = vmatprep.mubr.f32.mxu0 %v711
        %857 = vmatmul.mubr.f32.gmra.mrb[0].mxu0 %v710
        %v858 = vpop.f32.mrb[0].mxu0
        %v859 = vadd.f32 0.0, %v858
        %v860 = vpop.f32.mrb[0].mxu0
        %861 = vmatprep.mubr.f32.mxu0 %v713
        %862 = vmatmul.mubr.f32.gmra.mrb[0].mxu0 %v712
        %v863 = vpop.f32.mrb[0].mxu0
        %v864 = vadd.f32 0.0, %v863
        %v865 = vpop.f32.mrb[0].mxu0
        %866 = vmatprep.mubr.f32.mxu0 %v715
        %867 = vmatmul.mubr.f32.gmra.mrb[0].mxu0 %v714
        %v868 = vpop.f32.mrb[0].mxu0
        %v869 = vadd.f32 0.0, %v868
        %v870 = vpop.f32.mrb[0].mxu0
        %871 = vmatprep.mubr.f32.mxu0 %v717
        %872 = vmatmul.mubr.f32.gmra.mrb[0].mxu0 %v716
        %v873 = vpop.f32.mrb[0].mxu0
        %v874 = vadd.f32 0.0, %v873
        %v875 = vpop.f32.mrb[0].mxu0
        %876 = vmatprep.mubr.f32.mxu0 %v719
        %877 = vmatmul.mubr.f32.gmra.mrb[0].mxu0 %v718
        %v878 = vpop.f32.mrb[0].mxu0
        %v879 = vadd.f32 0.0, %v878
        %v880 = vpop.f32.mrb[0].mxu0
        %881 = vmatprep.mubr.f32.mxu0 %v721
        %882 = vmatmul.mubr.f32.gmra.mrb[0].mxu0 %v720
        %v883 = vpop.f32.mrb[0].mxu0
        %v884 = vadd.f32 0.0, %v883
        %v885 = vpop.f32.mrb[0].mxu0
        %886 = vmatprep.mubr.f32.mxu0 %v723
        %887 = vmatmul.mubr.f32.gmra.mrb[0].mxu0 %v722
        %v888 = vpop.f32.mrb[0].mxu0
        %v889 = vadd.f32 0.0, %v888
        %v890 = vpop.f32.mrb[0].mxu0
        %891 = vmatprep.mubr.f32.mxu0 %v725
        %892 = vmatmul.mubr.f32.gmra.mrb[0].mxu0 %v724
        %v893 = vpop.f32.mrb[0].mxu0
        %v894 = vadd.f32 0.0, %v893
        %v895 = vpop.f32.mrb[0].mxu0
        %896 = vmatprep.mubr.f32.mxu0 %v727
        %897 = vmatmul.mubr.f32.gmra.mrb[0].mxu0 %v726
        %v898 = vpop.f32.mrb[0].mxu0
        %v899 = vadd.f32 0.0, %v898
        %v900 = vpop.f32.mrb[0].mxu0
        %901 = vmatprep.mubr.f32.mxu0 %v729
        %902 = vmatmul.mubr.f32.gmra.mrb[0].mxu0 %v728
        %v903 = vpop.f32.mrb[0].mxu0
        %v904 = vadd.f32 0.0, %v903
        %v905 = vpop.f32.mrb[0].mxu0
        %906 = vdwg.mxu0
        %v907 = vadd.f32 %v682, %v829
        %v908 = vadd.f32 %v683, %v834
        %v909 = vadd.f32 %v684, %v839
        %v910 = vadd.f32 %v685, %v844
        %v911 = vadd.f32 %v686, %v849
        %v912 = vadd.f32 %v687, %v854
        %v913 = vadd.f32 %v688, %v859
        %v914 = vadd.f32 %v689, %v864
        %v915 = vadd.f32 %v690, %v869
        %v916 = vadd.f32 %v691, %v874
        %v917 = vadd.f32 %v692, %v879
        %v918 = vadd.f32 %v693, %v884
        %v919 = vadd.f32 %v694, %v889
        %v920 = vadd.f32 %v695, %v894
        %v921 = vadd.f32 %v696, %v899
        %v922 = vadd.f32 %v697, %v904
        %923 = vst [vmem:[#allocation2] sm:$0xff] %v907
        %924 = vst [vmem:[#allocation2 + $0x8] sm:$0xff] %v908
        %925 = vst [vmem:[#allocation2 + $0x10] sm:$0xff] %v909
        %926 = vst [vmem:[#allocation2 + $0x18] sm:$0xff] %v910
        %927 = vst [vmem:[#allocation2 + $0x20] sm:$0xff] %v911
        %928 = vst [vmem:[#allocation2 + $0x28] sm:$0xff] %v912
        %929 = vst [vmem:[#allocation2 + $0x30] sm:$0xff] %v913
        %930 = vst [vmem:[#allocation2 + $0x38] sm:$0xff] %v914
        %931 = vst [vmem:[#allocation2 + $0x40] sm:$0xff] %v915
        %932 = vst [vmem:[#allocation2 + $0x48] sm:$0xff] %v916
        %933 = vst [vmem:[#allocation2 + $0x50] sm:$0xff] %v917
        %934 = vst [vmem:[#allocation2 + $0x58] sm:$0xff] %v918
        %935 = vst [vmem:[#allocation2 + $0x60] sm:$0xff] %v919
        %936 = vst [vmem:[#allocation2 + $0x68] sm:$0xff] %v920
        %937 = vst [vmem:[#allocation2 + $0x70] sm:$0xff] %v921
        %938 = vst [vmem:[#allocation2 + $0x78] sm:$0xff] %v922
        // Predicated region
        $region33: #{tpu_custom_call.1} parent=27 // pred_check
          %p939 = pneg %p170
        $region34: #{tpu_custom_call.1} parent=27 // pred_check_branch
          %941 = sbr.rel (%p939) target = $region36
        $region35: #{tpu_custom_call.1} parent=27 // pred_region
          %v942 = vld [vmem:[#allocation2] sm:$0xff]
          %v943 = vld [vmem:[#allocation2 + $0x8] sm:$0xff]
          %v944 = vld [vmem:[#allocation2 + $0x10] sm:$0xff]
          %v945 = vld [vmem:[#allocation2 + $0x18] sm:$0xff]
          %v946 = vld [vmem:[#allocation2 + $0x20] sm:$0xff]
          %v947 = vld [vmem:[#allocation2 + $0x28] sm:$0xff]
          %v948 = vld [vmem:[#allocation2 + $0x30] sm:$0xff]
          %v949 = vld [vmem:[#allocation2 + $0x38] sm:$0xff]
          %v950 = vld [vmem:[#allocation2 + $0x40] sm:$0xff]
          %v951 = vld [vmem:[#allocation2 + $0x48] sm:$0xff]
          %v952 = vld [vmem:[#allocation2 + $0x50] sm:$0xff]
          %v953 = vld [vmem:[#allocation2 + $0x58] sm:$0xff]
          %v954 = vld [vmem:[#allocation2 + $0x60] sm:$0xff]
          %v955 = vld [vmem:[#allocation2 + $0x68] sm:$0xff]
          %v956 = vld [vmem:[#allocation2 + $0x70] sm:$0xff]
          %v957 = vld [vmem:[#allocation2 + $0x78] sm:$0xff]
          %v958 = vlaneseq
          %v959 = vshrl.u32 %v958, 7
          %v960 = vadd.s32 %v959, 8
          %v961 = vadd.s32 %v959, 16
          %v962 = vadd.s32 %v959, 24
          %v963 = vadd.s32 %v959, 32
          %v964 = vadd.s32 %v959, 40
          %v965 = vadd.s32 %v959, 48
          %v966 = vadd.s32 %v959, 56
          %v967 = vlaneseq
          %v968 = vand.u32 %v967, 127
          %v969 = vadd.s32 %v959, %v968
          %v970 = vadd.s32 %v960, %v968
          %v971 = vadd.s32 %v961, %v968
          %v972 = vadd.s32 %v962, %v968
          %v973 = vadd.s32 %v963, %v968
          %v974 = vadd.s32 %v964, %v968
          %v975 = vadd.s32 %v965, %v968
          %v976 = vadd.s32 %v966, %v968
          %vm977 = vcmp.eq.s32.totalorder %v969, 63
          %vm978 = vcmp.eq.s32.totalorder %v970, 63
          %vm979 = vcmp.eq.s32.totalorder %v971, 63
          %vm980 = vcmp.eq.s32.totalorder %v972, 63
          %vm981 = vcmp.eq.s32.totalorder %v973, 63
          %vm982 = vcmp.eq.s32.totalorder %v974, 63
          %vm983 = vcmp.eq.s32.totalorder %v975, 63
          %vm984 = vcmp.eq.s32.totalorder %v976, 63
          %v985 = vsel %vm977, 1, 0
          %v986 = vsel %vm978, 1, 0
          %v987 = vsel %vm979, 1, 0
          %v988 = vsel %vm980, 1, 0
          %v989 = vsel %vm981, 1, 0
          %v990 = vsel %vm982, 1, 0
          %v991 = vsel %vm983, 1, 0
          %v992 = vsel %vm984, 1, 0
          %v993 = vcvt.s32.f32 %v985
          %v994 = vcvt.s32.f32 %v986
          %v995 = vcvt.s32.f32 %v987
          %v996 = vcvt.s32.f32 %v988
          %v997 = vcvt.s32.f32 %v989
          %v998 = vcvt.s32.f32 %v990
          %v999 = vcvt.s32.f32 %v991
          %v1000 = vcvt.s32.f32 %v992
          %1009 = vrot.lane.b32.xlu0 %v942, 64
          %v1010 = vpop.permute.xlu0 %1009
          %1011 = vrot.lane.b32.xlu0 %v943, 64
          %v1012 = vpop.permute.xlu0 %1011
          %1013 = vrot.lane.b32.xlu0 %v944, 64
          %v1014 = vpop.permute.xlu0 %1013
          %1015 = vrot.lane.b32.xlu0 %v945, 64
          %v1016 = vpop.permute.xlu0 %1015
          %1017 = vrot.lane.b32.xlu0 %v946, 64
          %v1018 = vpop.permute.xlu0 %1017
          %1019 = vrot.lane.b32.xlu0 %v947, 64
          %v1020 = vpop.permute.xlu0 %1019
          %1021 = vrot.lane.b32.xlu0 %v948, 64
          %v1022 = vpop.permute.xlu0 %1021
          %1023 = vrot.lane.b32.xlu0 %v949, 64
          %v1024 = vpop.permute.xlu0 %1023
          %vm1033 = vcmask 523264
          %v1035 = vsel %vm1033, %v993, 0
          %v1038 = vsel %vm1033, %v994, 0
          %v1041 = vsel %vm1033, %v995, 0
          %v1044 = vsel %vm1033, %v996, 0
          %v1047 = vsel %vm1033, %v997, 0
          %v1050 = vsel %vm1033, %v998, 0
          %v1053 = vsel %vm1033, %v999, 0
          %v1056 = vsel %vm1033, %v1000, 0
          %1058 = vmatprep.subr.mxu0 0.0
          %1059 = vmatpush1.msra.mxu0 %v1010
          %1060 = vmatprep.subr.mxu0 0.0
          %1061 = vmatpush1.msra.mxu0 %v1012
          %1062 = vmatprep.subr.mxu0 0.0
          %1063 = vmatpush1.msra.mxu0 %v1014
          %1064 = vmatprep.subr.mxu0 0.0
          %1065 = vmatpush1.msra.mxu0 %v1016
          %1066 = vmatprep.subr.mxu0 0.0
          %1067 = vmatpush1.msra.mxu0 %v1018
          %1068 = vmatprep.subr.mxu0 0.0
          %1069 = vmatpush1.msra.mxu0 %v1020
          %1070 = vmatprep.subr.mxu0 0.0
          %1071 = vmatpush1.msra.mxu0 %v1022
          %1072 = vmatprep.subr.mxu0 0.0
          %1073 = vmatpush1.msra.mxu0 %v1024
          %1074 = vmatprep.subr.mxu0 0.0
          %1075 = vmatpush1.msra.mxu0 0.0
          %1076 = vmatprep.subr.mxu0 0.0
          %1077 = vmatpush1.msra.mxu0 0.0
          %1078 = vmatprep.subr.mxu0 0.0
          %1079 = vmatpush1.msra.mxu0 0.0
          %1080 = vmatprep.subr.mxu0 0.0
          %1081 = vmatpush1.msra.mxu0 0.0
          %1082 = vmatprep.subr.mxu0 0.0
          %1083 = vmatpush1.msra.mxu0 0.0
          %1084 = vmatprep.subr.mxu0 0.0
          %1085 = vmatpush1.msra.mxu0 0.0
          %1086 = vmatprep.subr.mxu0 0.0
          %1087 = vmatpush1.msra.mxu0 0.0
          %1088 = vmatprep.subr.mxu0 0.0
          %1089 = vmatpush1.msra.mxu0 0.0
          %1090 = vmatprep.subr.mxu0 0.0
          %1091 = vmatpush1.msra.mxu0 0.0
          %1092 = vmatprep.subr.mxu0 0.0
          %1093 = vmatpush1.msra.mxu0 0.0
          %1094 = vmatprep.subr.mxu0 0.0
          %1095 = vmatpush1.msra.mxu0 0.0
          %1096 = vmatprep.subr.mxu0 0.0
          %1097 = vmatpush1.msra.mxu0 0.0
          %1098 = vmatprep.subr.mxu0 0.0
          %1099 = vmatpush1.msra.mxu0 0.0
          %1100 = vmatprep.subr.mxu0 0.0
          %1101 = vmatpush1.msra.mxu0 0.0
          %1102 = vmatprep.subr.mxu0 0.0
          %1103 = vmatpush1.msra.mxu0 0.0
          %1104 = vmatprep.subr.mxu0 0.0
          %1105 = vmatpush1.msra.mxu0 0.0
          %1106 = vmatprep.subr.mxu0 0.0
          %1107 = vmatpush1.msra.mxu0 0.0
          %1108 = vmatprep.subr.mxu0 0.0
          %1109 = vmatpush1.msra.mxu0 0.0
          %1110 = vmatprep.subr.mxu0 0.0
          %1111 = vmatpush1.msra.mxu0 0.0
          %1112 = vmatprep.subr.mxu0 0.0
          %1113 = vmatpush1.msra.mxu0 0.0
          %1114 = vmatprep.subr.mxu0 0.0
          %1115 = vmatpush1.msra.mxu0 0.0
          %1116 = vmatprep.subr.mxu0 0.0
          %1117 = vmatpush1.msra.mxu0 0.0
          %1118 = vmatprep.subr.mxu0 0.0
          %1119 = vmatpush1.msra.mxu0 0.0
          %1120 = vmatprep.subr.mxu0 0.0
          %1121 = vmatpush1.msra.mxu0 0.0
          %1122 = vmatprep.mubr.f32.mxu0 0.0
          %1123 = vmatmul.mubr.f32.gmra.mrb[0].mxu0 %v1035
          %v1124 = vpop.f32.mrb[0].mxu0
          %v1125 = vadd.f32 0.0, %v1124
          %v1126 = vpop.f32.mrb[0].mxu0
          %1127 = vmatprep.mubr.f32.mxu0 0.0
          %1128 = vmatmul.mubr.f32.gmra.mrb[0].mxu0 %v1038
          %v1129 = vpop.f32.mrb[0].mxu0
          %v1130 = vadd.f32 0.0, %v1129
          %v1131 = vpop.f32.mrb[0].mxu0
          %1132 = vmatprep.mubr.f32.mxu0 0.0
          %1133 = vmatmul.mubr.f32.gmra.mrb[0].mxu0 %v1041
          %v1134 = vpop.f32.mrb[0].mxu0
          %v1135 = vadd.f32 0.0, %v1134
          %v1136 = vpop.f32.mrb[0].mxu0
          %1137 = vmatprep.mubr.f32.mxu0 0.0
          %1138 = vmatmul.mubr.f32.gmra.mrb[0].mxu0 %v1044
          %v1139 = vpop.f32.mrb[0].mxu0
          %v1140 = vadd.f32 0.0, %v1139
          %v1141 = vpop.f32.mrb[0].mxu0
          %1142 = vmatprep.mubr.f32.mxu0 0.0
          %1143 = vmatmul.mubr.f32.gmra.mrb[0].mxu0 %v1047
          %v1144 = vpop.f32.mrb[0].mxu0
          %v1145 = vadd.f32 0.0, %v1144
          %v1146 = vpop.f32.mrb[0].mxu0
          %1147 = vmatprep.mubr.f32.mxu0 0.0
          %1148 = vmatmul.mubr.f32.gmra.mrb[0].mxu0 %v1050
          %v1149 = vpop.f32.mrb[0].mxu0
          %v1150 = vadd.f32 0.0, %v1149
          %v1151 = vpop.f32.mrb[0].mxu0
          %1152 = vmatprep.mubr.f32.mxu0 0.0
          %1153 = vmatmul.mubr.f32.gmra.mrb[0].mxu0 %v1053
          %v1154 = vpop.f32.mrb[0].mxu0
          %v1155 = vadd.f32 0.0, %v1154
          %v1156 = vpop.f32.mrb[0].mxu0
          %1157 = vmatprep.mubr.f32.mxu0 0.0
          %1158 = vmatmul.mubr.f32.gmra.mrb[0].mxu0 %v1056
          %v1159 = vpop.f32.mrb[0].mxu0
          %v1160 = vadd.f32 0.0, %v1159
          %v1161 = vpop.f32.mrb[0].mxu0
          %1162 = vdwg.mxu0
          %1171 = vrot.lane.b32.xlu0 %v950, 64
          %v1172 = vpop.permute.xlu0 %1171
          %1173 = vrot.lane.b32.xlu0 %v951, 64
          %v1174 = vpop.permute.xlu0 %1173
          %1175 = vrot.lane.b32.xlu0 %v952, 64
          %v1176 = vpop.permute.xlu0 %1175
          %1177 = vrot.lane.b32.xlu0 %v953, 64
          %v1178 = vpop.permute.xlu0 %1177
          %1179 = vrot.lane.b32.xlu0 %v954, 64
          %v1180 = vpop.permute.xlu0 %1179
          %1181 = vrot.lane.b32.xlu0 %v955, 64
          %v1182 = vpop.permute.xlu0 %1181
          %1183 = vrot.lane.b32.xlu0 %v956, 64
          %v1184 = vpop.permute.xlu0 %1183
          %1185 = vrot.lane.b32.xlu0 %v957, 64
          %v1186 = vpop.permute.xlu0 %1185
          %1195 = vmatprep.subr.mxu0 0.0
          %1196 = vmatpush1.msra.mxu0 %v1172
          %1197 = vmatprep.subr.mxu0 0.0
          %1198 = vmatpush1.msra.mxu0 %v1174
          %1199 = vmatprep.subr.mxu0 0.0
          %1200 = vmatpush1.msra.mxu0 %v1176
          %1201 = vmatprep.subr.mxu0 0.0
          %1202 = vmatpush1.msra.mxu0 %v1178
          %1203 = vmatprep.subr.mxu0 0.0
          %1204 = vmatpush1.msra.mxu0 %v1180
          %1205 = vmatprep.subr.mxu0 0.0
          %1206 = vmatpush1.msra.mxu0 %v1182
          %1207 = vmatprep.subr.mxu0 0.0
          %1208 = vmatpush1.msra.mxu0 %v1184
          %1209 = vmatprep.subr.mxu0 0.0
          %1210 = vmatpush1.msra.mxu0 %v1186
          %1211 = vmatprep.subr.mxu0 0.0
          %1212 = vmatpush1.msra.mxu0 0.0
          %1213 = vmatprep.subr.mxu0 0.0
          %1214 = vmatpush1.msra.mxu0 0.0
          %1215 = vmatprep.subr.mxu0 0.0
          %1216 = vmatpush1.msra.mxu0 0.0
          %1217 = vmatprep.subr.mxu0 0.0
          %1218 = vmatpush1.msra.mxu0 0.0
          %1219 = vmatprep.subr.mxu0 0.0
          %1220 = vmatpush1.msra.mxu0 0.0
          %1221 = vmatprep.subr.mxu0 0.0
          %1222 = vmatpush1.msra.mxu0 0.0
          %1223 = vmatprep.subr.mxu0 0.0
          %1224 = vmatpush1.msra.mxu0 0.0
          %1225 = vmatprep.subr.mxu0 0.0
          %1226 = vmatpush1.msra.mxu0 0.0
          %1227 = vmatprep.subr.mxu0 0.0
          %1228 = vmatpush1.msra.mxu0 0.0
          %1229 = vmatprep.subr.mxu0 0.0
          %1230 = vmatpush1.msra.mxu0 0.0
          %1231 = vmatprep.subr.mxu0 0.0
          %1232 = vmatpush1.msra.mxu0 0.0
          %1233 = vmatprep.subr.mxu0 0.0
          %1234 = vmatpush1.msra.mxu0 0.0
          %1235 = vmatprep.subr.mxu0 0.0
          %1236 = vmatpush1.msra.mxu0 0.0
          %1237 = vmatprep.subr.mxu0 0.0
          %1238 = vmatpush1.msra.mxu0 0.0
          %1239 = vmatprep.subr.mxu0 0.0
          %1240 = vmatpush1.msra.mxu0 0.0
          %1241 = vmatprep.subr.mxu0 0.0
          %1242 = vmatpush1.msra.mxu0 0.0
          %1243 = vmatprep.subr.mxu0 0.0
          %1244 = vmatpush1.msra.mxu0 0.0
          %1245 = vmatprep.subr.mxu0 0.0
          %1246 = vmatpush1.msra.mxu0 0.0
          %1247 = vmatprep.subr.mxu0 0.0
          %1248 = vmatpush1.msra.mxu0 0.0
          %1249 = vmatprep.subr.mxu0 0.0
          %1250 = vmatpush1.msra.mxu0 0.0
          %1251 = vmatprep.subr.mxu0 0.0
          %1252 = vmatpush1.msra.mxu0 0.0
          %1253 = vmatprep.subr.mxu0 0.0
          %1254 = vmatpush1.msra.mxu0 0.0
          %1255 = vmatprep.subr.mxu0 0.0
          %1256 = vmatpush1.msra.mxu0 0.0
          %1257 = vmatprep.subr.mxu0 0.0
          %1258 = vmatpush1.msra.mxu0 0.0
          %1259 = vmatprep.mubr.f32.mxu0 0.0
          %1260 = vmatmul.mubr.f32.gmra.mrb[0].mxu0 %v1035
          %v1261 = vpop.f32.mrb[0].mxu0
          %v1262 = vadd.f32 0.0, %v1261
          %v1263 = vpop.f32.mrb[0].mxu0
          %1264 = vmatprep.mubr.f32.mxu0 0.0
          %1265 = vmatmul.mubr.f32.gmra.mrb[0].mxu0 %v1038
          %v1266 = vpop.f32.mrb[0].mxu0
          %v1267 = vadd.f32 0.0, %v1266
          %v1268 = vpop.f32.mrb[0].mxu0
          %1269 = vmatprep.mubr.f32.mxu0 0.0
          %1270 = vmatmul.mubr.f32.gmra.mrb[0].mxu0 %v1041
          %v1271 = vpop.f32.mrb[0].mxu0
          %v1272 = vadd.f32 0.0, %v1271
          %v1273 = vpop.f32.mrb[0].mxu0
          %1274 = vmatprep.mubr.f32.mxu0 0.0
          %1275 = vmatmul.mubr.f32.gmra.mrb[0].mxu0 %v1044
          %v1276 = vpop.f32.mrb[0].mxu0
          %v1277 = vadd.f32 0.0, %v1276
          %v1278 = vpop.f32.mrb[0].mxu0
          %1279 = vmatprep.mubr.f32.mxu0 0.0
          %1280 = vmatmul.mubr.f32.gmra.mrb[0].mxu0 %v1047
          %v1281 = vpop.f32.mrb[0].mxu0
          %v1282 = vadd.f32 0.0, %v1281
          %v1283 = vpop.f32.mrb[0].mxu0
          %1284 = vmatprep.mubr.f32.mxu0 0.0
          %1285 = vmatmul.mubr.f32.gmra.mrb[0].mxu0 %v1050
          %v1286 = vpop.f32.mrb[0].mxu0
          %v1287 = vadd.f32 0.0, %v1286
          %v1288 = vpop.f32.mrb[0].mxu0
          %1289 = vmatprep.mubr.f32.mxu0 0.0
          %1290 = vmatmul.mubr.f32.gmra.mrb[0].mxu0 %v1053
          %v1291 = vpop.f32.mrb[0].mxu0
          %v1292 = vadd.f32 0.0, %v1291
          %v1293 = vpop.f32.mrb[0].mxu0
          %1294 = vmatprep.mubr.f32.mxu0 0.0
          %1295 = vmatmul.mubr.f32.gmra.mrb[0].mxu0 %v1056
          %v1296 = vpop.f32.mrb[0].mxu0
          %v1297 = vadd.f32 0.0, %v1296
          %v1298 = vpop.f32.mrb[0].mxu0
          %1299 = vdwg.mxu0
          %v1301 = vsel %vm1033, %v1262, 0
          %v1304 = vsel %vm1033, %v1267, 0
          %v1307 = vsel %vm1033, %v1272, 0
          %v1310 = vsel %vm1033, %v1277, 0
          %v1313 = vsel %vm1033, %v1282, 0
          %v1316 = vsel %vm1033, %v1287, 0
          %v1319 = vsel %vm1033, %v1292, 0
          %v1322 = vsel %vm1033, %v1297, 0
          %1324 = vmatprep.subr.mxu0 0.0
          %1325 = vmatpush1.msra.mxu0 %v993
          %1326 = vmatprep.subr.mxu0 0.0
          %1327 = vmatpush1.msra.mxu0 %v994
          %1328 = vmatprep.subr.mxu0 0.0
          %1329 = vmatpush1.msra.mxu0 %v995
          %1330 = vmatprep.subr.mxu0 0.0
          %1331 = vmatpush1.msra.mxu0 %v996
          %1332 = vmatprep.subr.mxu0 0.0
          %1333 = vmatpush1.msra.mxu0 %v997
          %1334 = vmatprep.subr.mxu0 0.0
          %1335 = vmatpush1.msra.mxu0 %v998
          %1336 = vmatprep.subr.mxu0 0.0
          %1337 = vmatpush1.msra.mxu0 %v999
          %1338 = vmatprep.subr.mxu0 0.0
          %1339 = vmatpush1.msra.mxu0 %v1000
          %1340 = vmatprep.subr.mxu0 0.0
          %1341 = vmatpush1.msra.mxu0 0.0
          %1342 = vmatprep.subr.mxu0 0.0
          %1343 = vmatpush1.msra.mxu0 0.0
          %1344 = vmatprep.subr.mxu0 0.0
          %1345 = vmatpush1.msra.mxu0 0.0
          %1346 = vmatprep.subr.mxu0 0.0
          %1347 = vmatpush1.msra.mxu0 0.0
          %1348 = vmatprep.subr.mxu0 0.0
          %1349 = vmatpush1.msra.mxu0 0.0
          %1350 = vmatprep.subr.mxu0 0.0
          %1351 = vmatpush1.msra.mxu0 0.0
          %1352 = vmatprep.subr.mxu0 0.0
          %1353 = vmatpush1.msra.mxu0 0.0
          %1354 = vmatprep.subr.mxu0 0.0
          %1355 = vmatpush1.msra.mxu0 0.0
          %1356 = vmatprep.subr.mxu0 0.0
          %1357 = vmatpush1.msra.mxu0 0.0
          %1358 = vmatprep.subr.mxu0 0.0
          %1359 = vmatpush1.msra.mxu0 0.0
          %1360 = vmatprep.subr.mxu0 0.0
          %1361 = vmatpush1.msra.mxu0 0.0
          %1362 = vmatprep.subr.mxu0 0.0
          %1363 = vmatpush1.msra.mxu0 0.0
          %1364 = vmatprep.subr.mxu0 0.0
          %1365 = vmatpush1.msra.mxu0 0.0
          %1366 = vmatprep.subr.mxu0 0.0
          %1367 = vmatpush1.msra.mxu0 0.0
          %1368 = vmatprep.subr.mxu0 0.0
          %1369 = vmatpush1.msra.mxu0 0.0
          %1370 = vmatprep.subr.mxu0 0.0
          %1371 = vmatpush1.msra.mxu0 0.0
          %1372 = vmatprep.subr.mxu0 0.0
          %1373 = vmatpush1.msra.mxu0 0.0
          %1374 = vmatprep.subr.mxu0 0.0
          %1375 = vmatpush1.msra.mxu0 0.0
          %1376 = vmatprep.subr.mxu0 0.0
          %1377 = vmatpush1.msra.mxu0 0.0
          %1378 = vmatprep.subr.mxu0 0.0
          %1379 = vmatpush1.msra.mxu0 0.0
          %1380 = vmatprep.subr.mxu0 0.0
          %1381 = vmatpush1.msra.mxu0 0.0
          %1382 = vmatprep.subr.mxu0 0.0
          %1383 = vmatpush1.msra.mxu0 0.0
          %1384 = vmatprep.subr.mxu0 0.0
          %1385 = vmatpush1.msra.mxu0 0.0
          %1386 = vmatprep.subr.mxu0 0.0
          %1387 = vmatpush1.msra.mxu0 0.0
          %1388 = vmatprep.mubr.f32.mxu0 0.0
          %1389 = vmatmul.mubr.f32.gmra.mrb[0].mxu0 %v1301
          %v1390 = vpop.f32.mrb[0].mxu0
          %v1391 = vadd.f32 0.0, %v1390
          %v1392 = vpop.f32.mrb[0].mxu0
          %1393 = vmatprep.mubr.f32.mxu0 0.0
          %1394 = vmatmul.mubr.f32.gmra.mrb[0].mxu0 %v1304
          %v1395 = vpop.f32.mrb[0].mxu0
          %v1396 = vadd.f32 0.0, %v1395
          %v1397 = vpop.f32.mrb[0].mxu0
          %1398 = vmatprep.mubr.f32.mxu0 0.0
          %1399 = vmatmul.mubr.f32.gmra.mrb[0].mxu0 %v1307
          %v1400 = vpop.f32.mrb[0].mxu0
          %v1401 = vadd.f32 0.0, %v1400
          %v1402 = vpop.f32.mrb[0].mxu0
          %1403 = vmatprep.mubr.f32.mxu0 0.0
          %1404 = vmatmul.mubr.f32.gmra.mrb[0].mxu0 %v1310
          %v1405 = vpop.f32.mrb[0].mxu0
          %v1406 = vadd.f32 0.0, %v1405
          %v1407 = vpop.f32.mrb[0].mxu0
          %1408 = vmatprep.mubr.f32.mxu0 0.0
          %1409 = vmatmul.mubr.f32.gmra.mrb[0].mxu0 %v1313
          %v1410 = vpop.f32.mrb[0].mxu0
          %v1411 = vadd.f32 0.0, %v1410
          %v1412 = vpop.f32.mrb[0].mxu0
          %1413 = vmatprep.mubr.f32.mxu0 0.0
          %1414 = vmatmul.mubr.f32.gmra.mrb[0].mxu0 %v1316
          %v1415 = vpop.f32.mrb[0].mxu0
          %v1416 = vadd.f32 0.0, %v1415
          %v1417 = vpop.f32.mrb[0].mxu0
          %1418 = vmatprep.mubr.f32.mxu0 0.0
          %1419 = vmatmul.mubr.f32.gmra.mrb[0].mxu0 %v1319
          %v1420 = vpop.f32.mrb[0].mxu0
          %v1421 = vadd.f32 0.0, %v1420
          %v1422 = vpop.f32.mrb[0].mxu0
          %1423 = vmatprep.mubr.f32.mxu0 0.0
          %1424 = vmatmul.mubr.f32.gmra.mrb[0].mxu0 %v1322
          %v1425 = vpop.f32.mrb[0].mxu0
          %v1426 = vadd.f32 0.0, %v1425
          %v1427 = vpop.f32.mrb[0].mxu0
          %1428 = vdwg.mxu0
          %v1429 = vsel %vm1033, %v942, 0.0
          %v1430 = vsel %vm1033, %v943, 0.0
          %v1431 = vadd.f32 %v1429, %v1430
          %v1432 = vsel %vm1033, %v944, 0.0
          %v1433 = vadd.f32 %v1431, %v1432
          %v1434 = vsel %vm1033, %v945, 0.0
          %v1435 = vadd.f32 %v1433, %v1434
          %v1436 = vsel %vm1033, %v946, 0.0
          %v1437 = vadd.f32 %v1435, %v1436
          %v1438 = vsel %vm1033, %v947, 0.0
          %v1439 = vadd.f32 %v1437, %v1438
          %v1440 = vsel %vm1033, %v948, 0.0
          %v1441 = vadd.f32 %v1439, %v1440
          %v1442 = vsel %vm1033, %v949, 0.0
          %v1443 = vadd.f32 %v1441, %v1442
          %1444 = vadd.xlane.f32.xlu0 %v1443
          %v1445 = vpop.xlane.xlu0 %1444
          %v1446 = vrot.slane %v1445, 4
          %v1447 = vadd.f32 %v1445, %v1446
          %v1448 = vrot.slane %v1447, 2
          %v1449 = vadd.f32 %v1447, %v1448
          %v1450 = vrot.slane %v1449, 1
          %v1451 = vadd.f32 %v1449, %v1450
          %s1452 = vtos %v1451
          %v1453 = vsel %vm1033, %v1010, 0.0
          %v1454 = vsel %vm1033, %v1012, 0.0
          %v1455 = vadd.f32 %v1453, %v1454
          %v1456 = vsel %vm1033, %v1014, 0.0
          %v1457 = vadd.f32 %v1455, %v1456
          %v1458 = vsel %vm1033, %v1016, 0.0
          %v1459 = vadd.f32 %v1457, %v1458
          %v1460 = vsel %vm1033, %v1018, 0.0
          %v1461 = vadd.f32 %v1459, %v1460
          %v1462 = vsel %vm1033, %v1020, 0.0
          %v1463 = vadd.f32 %v1461, %v1462
          %v1464 = vsel %vm1033, %v1022, 0.0
          %v1465 = vadd.f32 %v1463, %v1464
          %v1466 = vsel %vm1033, %v1024, 0.0
          %v1467 = vadd.f32 %v1465, %v1466
          %1468 = vadd.xlane.f32.xlu0 %v1467
          %v1469 = vpop.xlane.xlu0 %1468
          %v1470 = vrot.slane %v1469, 4
          %v1471 = vadd.f32 %v1469, %v1470
          %v1472 = vrot.slane %v1471, 2
          %v1473 = vadd.f32 %v1471, %v1472
          %v1474 = vrot.slane %v1473, 1
          %v1475 = vadd.f32 %v1473, %v1474
          %s1476 = vtos %v1475
          %s1477 = sadd.f32 %s1452, %s1476
          %v1478 = vsel %vm1033, %v1172, 0.0
          %v1479 = vsel %vm1033, %v1174, 0.0
          %v1480 = vadd.f32 %v1478, %v1479
          %v1481 = vsel %vm1033, %v1176, 0.0
          %v1482 = vadd.f32 %v1480, %v1481
          %v1483 = vsel %vm1033, %v1178, 0.0
          %v1484 = vadd.f32 %v1482, %v1483
          %v1485 = vsel %vm1033, %v1180, 0.0
          %v1486 = vadd.f32 %v1484, %v1485
          %v1487 = vsel %vm1033, %v1182, 0.0
          %v1488 = vadd.f32 %v1486, %v1487
          %v1489 = vsel %vm1033, %v1184, 0.0
          %v1490 = vadd.f32 %v1488, %v1489
          %v1491 = vsel %vm1033, %v1186, 0.0
          %v1492 = vadd.f32 %v1490, %v1491
          %1493 = vadd.xlane.f32.xlu0 %v1492
          %v1494 = vpop.xlane.xlu0 %1493
          %v1495 = vrot.slane %v1494, 4
          %v1496 = vadd.f32 %v1494, %v1495
          %v1497 = vrot.slane %v1496, 2
          %v1498 = vadd.f32 %v1496, %v1497
          %v1499 = vrot.slane %v1498, 1
          %v1500 = vadd.f32 %v1498, %v1499
          %s1501 = vtos %v1500
          %s1502 = sadd.f32 %s1477, %s1501
          %s1503 = sadd.f32 %s1502, 1e-06
          %v1504 = vstv %s1503
          %v1505 = vrcp.pop %v1504
          %s1506 = vtos %v1505
          %v1507 = vstv %s1506
          %v1508 = vmul.f32 %v942, %v1507
          %v1509 = vmul.f32 %v943, %v1507
          %v1510 = vmul.f32 %v944, %v1507
          %v1511 = vmul.f32 %v945, %v1507
          %v1512 = vmul.f32 %v946, %v1507
          %v1513 = vmul.f32 %v947, %v1507
          %v1514 = vmul.f32 %v948, %v1507
          %v1515 = vmul.f32 %v949, %v1507
          %1516 = vst.msk [vmem:[%s159] sm:$0xff] %vm1033, %v1508
          %1517 = vst.msk [vmem:[%s159 + $0x8] sm:$0xff] %vm1033, %v1509
          %1518 = vst.msk [vmem:[%s159 + $0x10] sm:$0xff] %vm1033, %v1510
          %1519 = vst.msk [vmem:[%s159 + $0x18] sm:$0xff] %vm1033, %v1511
          %1520 = vst.msk [vmem:[%s159 + $0x20] sm:$0xff] %vm1033, %v1512
          %1521 = vst.msk [vmem:[%s159 + $0x28] sm:$0xff] %vm1033, %v1513
          %1522 = vst.msk [vmem:[%s159 + $0x30] sm:$0xff] %vm1033, %v1514
          %1523 = vst.msk [vmem:[%s159 + $0x38] sm:$0xff] %vm1033, %v1515
          %v1524 = vmul.f32 %v1125, %v1507
          %v1525 = vmul.f32 %v1130, %v1507
          %v1526 = vmul.f32 %v1135, %v1507
          %v1527 = vmul.f32 %v1140, %v1507
          %v1528 = vmul.f32 %v1145, %v1507
          %v1529 = vmul.f32 %v1150, %v1507
          %v1530 = vmul.f32 %v1155, %v1507
          %v1531 = vmul.f32 %v1160, %v1507
          %s1532 = scalar_lea.vmem %s159, 64 [#allocation5]
          %1533 = vst.msk [vmem:[%s1532] sm:$0xff] %vm1033, %v1524
          %1534 = vst.msk [vmem:[%s1532 + $0x8] sm:$0xff] %vm1033, %v1525
          %1535 = vst.msk [vmem:[%s1532 + $0x10] sm:$0xff] %vm1033, %v1526
          %1536 = vst.msk [vmem:[%s1532 + $0x18] sm:$0xff] %vm1033, %v1527
          %1537 = vst.msk [vmem:[%s1532 + $0x20] sm:$0xff] %vm1033, %v1528
          %1538 = vst.msk [vmem:[%s1532 + $0x28] sm:$0xff] %vm1033, %v1529
          %1539 = vst.msk [vmem:[%s1532 + $0x30] sm:$0xff] %vm1033, %v1530
          %1540 = vst.msk [vmem:[%s1532 + $0x38] sm:$0xff] %vm1033, %v1531
          %v1541 = vmul.f32 %v1391, %v1507
          %v1542 = vmul.f32 %v1396, %v1507
          %v1543 = vmul.f32 %v1401, %v1507
          %v1544 = vmul.f32 %v1406, %v1507
          %v1545 = vmul.f32 %v1411, %v1507
          %v1546 = vmul.f32 %v1416, %v1507
          %v1547 = vmul.f32 %v1421, %v1507
          %v1548 = vmul.f32 %v1426, %v1507
          %s1549 = scalar_lea.vmem %s159, 128 [#allocation5]
          %1550 = vst.msk [vmem:[%s1549] sm:$0xff] %vm1033, %v1541
          %1551 = vst.msk [vmem:[%s1549 + $0x8] sm:$0xff] %vm1033, %v1542
          %1552 = vst.msk [vmem:[%s1549 + $0x10] sm:$0xff] %vm1033, %v1543
          %1553 = vst.msk [vmem:[%s1549 + $0x18] sm:$0xff] %vm1033, %v1544
          %1554 = vst.msk [vmem:[%s1549 + $0x20] sm:$0xff] %vm1033, %v1545
          %1555 = vst.msk [vmem:[%s1549 + $0x28] sm:$0xff] %vm1033, %v1546
          %1556 = vst.msk [vmem:[%s1549 + $0x30] sm:$0xff] %vm1033, %v1547
          %1557 = vst.msk [vmem:[%s1549 + $0x38] sm:$0xff] %vm1033, %v1548
        $region36: #{tpu_custom_call.1} parent=27 // pred_fallthru
          _
        %s1558 = sand.u32 %s85, 1
        %s1559 = scalar_lea.sflag [#allocation6], %s1558
        %s1560 = sand.u32 %s85, 1
        %s1561 = smul.addr %s1560, 192
        %s1562 = scalar_lea.vmem [#allocation5], %s1561
        // Predicated region
        $region37: #{tpu_custom_call.1} parent=27 // pred_check
          %p1563 = pneg %p95
        $region38: #{tpu_custom_call.1} parent=27 // pred_check_branch
          %1565 = sbr.rel (%p1563) target = $region40
        $region39: #{tpu_custom_call.1} parent=27 // pred_region
          %s1567 = ssub.s32 3072, 3072
          %1568 = vsyncadd %s1559, %s1567
          %s1569 = smul.addr %s20, 24
          %s1570 = smul.addr %s1569, 128
          %s1571 = scalar_lea.hbm %s2, %s1570
          %s1572 = sshll.u32 %s1562, 4
          %s1573 = int_to_ptr.vmem [resolvable:$true] %s1572
          %1578 = dma.vmem_to_hbm [thread:$0]  %s1573, 3072, %s1571, %s1559, 128, 128, 8
        $region40: #{tpu_custom_call.1} parent=27 // pred_fallthru
          _
      $region28: #{tpu_custom_call.1} parent=5 // pred_fallthru
        _
      %p1579 = scmp.le.s32.totalorder 2, %s11
      // Predicated region
      $region41: #{tpu_custom_call.1} parent=5 // pred_check
        %p1580 = pneg %p1579
      $region42: #{tpu_custom_call.1} parent=5 // pred_check_branch
        %1582 = sbr.rel (%p1580) target = $region44
      $region43: #{tpu_custom_call.1} parent=5 // pred_region
        %s1583 = ssub.s32 %s11, 2
        // Predicated region
        $region45: #{tpu_custom_call.1} parent=43 // pred_check
          %p1584 = pneg %p101
        $region46: #{tpu_custom_call.1} parent=43 // pred_check_branch
          %1586 = sbr.rel (%p1584) target = $region48
        $region47: #{tpu_custom_call.1} parent=43 // pred_region
          %s1587 = sand.u32 %s86, 1
          %s1588 = scalar_lea.sflag [#allocation6], %s1587
          %s1589 = sand.u32 %s86, 1
          %s1590 = smul.addr %s1589, 192
          %s1591 = scalar_lea.vmem [#allocation5], %s1590
          %1592 = dma.done %s1588, 3072
        $region48: #{tpu_custom_call.1} parent=43 // pred_fallthru
          _
      $region44: #{tpu_custom_call.1} parent=5 // pred_fallthru
        _
    $region6: #{tpu_custom_call.1} parent=1 // loop_footer
      %s15 = sadd.s32 1, %s11
    $region7: #{tpu_custom_call.1} parent=1 // loop_footer_branch
      %10 = sbr.rel target = $region3
    $region8: #{tpu_custom_call.1} parent=1 // loop_exit
      _
    %1593 = vsyncpa [#allocation6], 1
    %s1594 = scalar_lea.sflag [#allocation6], 1
    %1595 = vsyncpa %s1594, 1

</llo_original>
